<compile_context>
chip_gen: v5e
topology: v5e:2x2
jax: 0.10.0
libtpu: 0.0.40
codegen_flags: <defaults>
</compile_context>

<pallas_src>
import functools

import jax
import jax.numpy as jnp
from jax.experimental import pallas as pl
from jax.experimental.pallas import tpu as pltpu


# ----------------------------- Pallas kernel ------------------------------- #

def deep_lstm_kernel(x_ref,
                     wx1_ref, bx1_ref, wx2_ref, bx2_ref, wx3_ref, bx3_ref,
                     wh1_ref, bh1_ref, wh2_ref, bh2_ref, wh3_ref, bh3_ref,
                     wf1_ref, bf1_ref, wf2_ref, bf2_ref, wf3_ref, bf3_ref,
                     out_ref, hn_out_ref,
                     *, seq_len, batch, hidden):
    T, B, H = seq_len, batch, hidden

    # ---- x-path gate preacts for ALL timesteps (hoisted out of the recurrence) ----
    # x_ref is (T*B, D) in t-major order; fused gate weights give (T*B, 4) sigmoids.
    xf = x_ref[...]
    h = jnp.maximum(
        jnp.dot(xf, wx1_ref[...], preferred_element_type=jnp.float32) + bx1_ref[...], 0.0)
    h = jnp.maximum(
        jnp.dot(h, wx2_ref[...], preferred_element_type=jnp.float32) + bx2_ref[...], 0.0)
    ax = jax.nn.sigmoid(
        jnp.dot(h, wx3_ref[...], preferred_element_type=jnp.float32) + bx3_ref[...])
    # `ax` stays a value (<= a couple of vregs here); no VMEM scratch round trips.

    # Hoist only the layer-1 h-path weight; pre-broadcast biases once (not per step).
    wh1 = wh1_ref[...]                                                  # (H, 4H)
    bh1 = jnp.broadcast_to(bh1_ref[...], (B, bh1_ref.shape[-1]))        # (B, 4H)
    bh2 = jnp.broadcast_to(bh2_ref[...], (B, bh2_ref.shape[-1]))        # (B, 4M)
    bh3 = jnp.broadcast_to(bh3_ref[...], (B, bh3_ref.shape[-1]))        # (B, 4)

    # Column scale so one sigmoid pass covers F, I, O and tanh(a_C)=2*sigmoid(2 a_C)-1.
    col = jax.lax.broadcasted_iota(jnp.int32, (B, 4), dimension=1)
    gate_scale = jnp.where(col == 3, 2.0, 1.0).astype(jnp.float32)      # [1,1,1,2]

    hn = jnp.zeros((B, H), jnp.float32)
    cn = jnp.zeros((B, H), jnp.float32)

    # Static unroll of the (inherently serial) time loop; T is small.
    for t in range(T):
        ax_t = ax[t * B:(t + 1) * B, :]                                 # static slice, (B,4)

        # fused h-path: 3 matmuls produce all 4 gate preacts at once.
        h1 = jnp.maximum(
            jnp.dot(hn, wh1, preferred_element_type=jnp.float32) + bh1, 0.0)        # (B,4H)
        h2 = jnp.maximum(
            jnp.dot(h1, wh2_ref[...], preferred_element_type=jnp.float32) + bh2, 0.0)  # (B,4M)
        ah = jax.nn.sigmoid(
            jnp.dot(h2, wh3_ref[...], preferred_element_type=jnp.float32) + bh3)       # (B,4)

        a = (ah + ax_t) * gate_scale                     # gate order: F, I, O, C_hat
        s = jax.nn.sigmoid(a)                            # ONE EUP pass for all 4 gates
        f = s[:, 0:1]
        i = s[:, 1:2]
        o = s[:, 2:3]
        c_hat = 2.0 * s[:, 3:4] - 1.0                    # tanh via scaled-sigmoid identity

        cn = f * cn + i * c_hat                          # (B,1) broadcasts over (B,H)
        hn = o * jnp.tanh(cn)

    # -------------------------------- fc head --------------------------------------
    f1 = jnp.maximum(
        jnp.dot(hn, wf1_ref[...], preferred_element_type=jnp.float32) + bf1_ref[...], 0.0)  # (B,1)
    # (B,1) @ (1,M) is a rank-1 outer product -> VPU broadcast multiply, not an MXU dot.
    f2 = jnp.maximum(f1 * wf2_ref[...] + bf2_ref[...], 0.0)                                 # (B,M)
    inner = jax.nn.sigmoid(
        jnp.dot(f2, wf3_ref[...], preferred_element_type=jnp.float32) + bf3_ref[...])       # (B,1)

    out_ref[...] = jax.nn.sigmoid(inner)      # outer Sigmoid in self.fc
    hn_out_ref[...] = hn


# ------------------------------- Wrapper ------------------------------------ #

def _full_spec(shape):
    nd = len(shape)
    return pl.BlockSpec(shape, lambda i, nd=nd: (0,) * nd)


def _padded_f32_bytes(shape):
    """f32 bytes after (8,128) tile padding of the last two dims."""
    r, c = shape[-2], shape[-1]
    lead = 1
    for d in shape[:-2]:
        lead *= d
    return lead * (-(-r // 8) * 8) * (-(-c // 128) * 128) * 4


def _block_diag(blocks):
    rows = sum(b.shape[0] for b in blocks)
    cols = sum(b.shape[1] for b in blocks)
    out = jnp.zeros((rows, cols), blocks[0].dtype)
    r = c = 0
    for b in blocks:
        out = out.at[r:r + b.shape[0], c:c + b.shape[1]].set(b)
        r += b.shape[0]
        c += b.shape[1]
    return out


def fuse_params(params):
    """Fuse the 4 per-gate MLPs into concatenated / block-diagonal matrices."""
    def cat_w(w):   # (4, in, out) -> (in, 4*out)
        return jnp.concatenate([w[g] for g in range(4)], axis=1)

    def cat_b(b):   # (4, 1, out) -> (1, 4*out)
        return jnp.concatenate([b[g] for g in range(4)], axis=1)

    def bd(w):      # (4, in, out) -> block-diagonal (4*in, 4*out)
        return _block_diag([w[g] for g in range(4)])

    fused = {
        'wx1': cat_w(params['wx1']), 'bx1': cat_b(params['bx1']),
        'wx2': bd(params['wx2']),    'bx2': cat_b(params['bx2']),
        'wx3': bd(params['wx3']),    'bx3': cat_b(params['bx3']),
        'wh1': cat_w(params['wh1']), 'bh1': cat_b(params['bh1']),
        'wh2': bd(params['wh2']),    'bh2': cat_b(params['bh2']),
        'wh3': bd(params['wh3']),    'bh3': cat_b(params['bh3']),
    }
    for k in ('wf1', 'bf1', 'wf2', 'bf2', 'wf3', 'bf3'):
        fused[k] = params[k]
    return fused


def deep_lstm_forward(x, fused, hidden_size):
    B, T, D = x.shape
    H = hidden_size

    # t-major flattening so the kernel can do one fused x-path matmul pass and take
    # contiguous per-step row slices.  Negligible here; for large T/B accept x already
    # as (T, B, D) (or stream T-chunks through a grid axis) to avoid this HBM transpose.
    x_flat = jnp.transpose(x, (1, 0, 2)).reshape(T * B, D)

    args = [x_flat,
            fused['wx1'], fused['bx1'], fused['wx2'], fused['bx2'], fused['wx3'], fused['bx3'],
            fused['wh1'], fused['bh1'], fused['wh2'], fused['bh2'], fused['wh3'], fused['bh3'],
            fused['wf1'], fused['bf1'], fused['wf2'], fused['bf2'], fused['wf3'], fused['bf3']]
    in_specs = [_full_spec(a.shape) for a in args]

    out_shapes = (jax.ShapeDtypeStruct((B, 1), jnp.float32),
                  jax.ShapeDtypeStruct((B, H), jnp.float32))
    out_specs = (pl.BlockSpec((B, 1), lambda i: (0, 0)),
                 pl.BlockSpec((B, H), lambda i: (0, 0)))

    # Size the VMEM budget from actual padded operands (inputs double-buffered).
    vmem_need = 2 * sum(_padded_f32_bytes(a.shape) for a in args)
    vmem_need += 2 * sum(_padded_f32_bytes(s.shape) for s in out_shapes)
    vmem_limit = int(min(100 * 1024 * 1024, max(4 * 1024 * 1024, 2 * vmem_need)))

    kernel = functools.partial(deep_lstm_kernel, seq_len=T, batch=B, hidden=H)

    out, hn = pl.pallas_call(
        kernel,
        out_shape=out_shapes,
        grid_spec=pltpu.PrefetchScalarGridSpec(
            num_scalar_prefetch=0,
            grid=(1,),                        # single invocation; time loop in-kernel
            in_specs=in_specs,
            out_specs=out_specs,
        ),
        compiler_params=pltpu.CompilerParams(
            dimension_semantics=("arbitrary",),
            vmem_limit_bytes=vmem_limit),
    )(*args)
    return out, hn


# ---------------------- deterministic parameter init ----------------------- #

def init_params(input_size, hidden_size, mlp_hidden, key):
    H, D, M = hidden_size, input_size, mlp_hidden

    def lin(k, fan_in, fan_out):
        bound = float(fan_in) ** -0.5
        kw, kb = jax.random.split(k)
        w = jax.random.uniform(kw, (fan_in, fan_out), jnp.float32, -bound, bound)
        b = jax.random.uniform(kb, (1, fan_out), jnp.float32, -bound, bound)
        return w, b

    keys = iter(jax.random.split(key, 4 * 6 + 3))
    stacks = {k: [] for k in ['wh1', 'bh1', 'wh2', 'bh2', 'wh3', 'bh3',
                              'wx1', 'bx1', 'wx2', 'bx2', 'wx3', 'bx3']}
    # gate order: F, I, O, C_hat
    for _ in range(4):
        w, b = lin(next(keys), H, H); stacks['wh1'].append(w); stacks['bh1'].append(b)
        w, b = lin(next(keys), H, M); stacks['wh2'].append(w); stacks['bh2'].append(b)
        w, b = lin(next(keys), M, 1); stacks['wh3'].append(w); stacks['bh3'].append(b)
        w, b = lin(next(keys), D, H); stacks['wx1'].append(w); stacks['bx1'].append(b)
        w, b = lin(next(keys), H, M); stacks['wx2'].append(w); stacks['bx2'].append(b)
        w, b = lin(next(keys), M, 1); stacks['wx3'].append(w); stacks['bx3'].append(b)

    params = {k: jnp.stack(v) for k, v in stacks.items()}
    params['wf1'], params['bf1'] = lin(next(keys), H, 1)
    params['wf2'], params['bf2'] = lin(next(keys), 1, M)
    params['wf3'], params['bf3'] = lin(next(keys), M, 1)
    return params


# ------------------------- pure-JAX reference (check) ----------------------- #

def deep_lstm_ref(x, params):
    B, T, D = x.shape
    H = params['wh1'].shape[-1]

    def dnn(inp, w1, b1, w2, b2, w3, b3):
        h = jax.nn.relu(inp @ w1 + b1)
        h = jax.nn.relu(h @ w2 + b2)
        return jax.nn.sigmoid(h @ w3 + b3)

    hn = jnp.zeros((B, H), jnp.float32)
    cn = jnp.zeros((B, H), jnp.float32)
    for t in range(T):
        xt = x[:, t, :]
        pre = []
        for g in range(4):
            a = dnn(hn, params['wh1'][g], params['bh1'][g], params['wh2'][g],
                    params['bh2'][g], params['wh3'][g], params['bh3'][g]) \
              + dnn(xt, params['wx1'][g], params['bx1'][g], params['wx2'][g],
                    params['bx2'][g], params['wx3'][g], params['bx3'][g])
            pre.append(a)
        F = jax.nn.sigmoid(pre[0])
        I = jax.nn.sigmoid(pre[1])
        O = jax.nn.sigmoid(pre[2])
        C_hat = jnp.tanh(pre[3])
        cn = F * cn + I * C_hat
        hn = O * jnp.tanh(cn)
    out = jax.nn.sigmoid(dnn(hn, params['wf1'], params['bf1'], params['wf2'],
                             params['bf2'], params['wf3'], params['bf3']))
    return out, hn


# --------------------------------- main ------------------------------------- #

if __name__ == "__main__":
    B, T, D, H, M = 2, 8, 4, 32, 16        # batch, seq, input_size, hidden_size, mlp
    key = jax.random.PRNGKey(0)
    kx, kp = jax.random.split(key)
    x = jax.random.normal(kx, (B, T, D), jnp.float32)
    params = init_params(D, H, M, kp)
    fused = fuse_params(params)

    out, hn = deep_lstm_forward(x, fused, H)
    jax.block_until_ready((out, hn))

    out_r, hn_r = deep_lstm_ref(x, params)
    assert out.shape == (B, 1) and hn.shape == (B, H)
    assert jnp.allclose(out, out_r, atol=1e-2, rtol=1e-2)
    assert jnp.allclose(hn, hn_r, atol=1e-2, rtol=1e-2)

    print("KERNEL_OK")
</pallas_src>

<mosaic_0001>
module attributes {stable_mosaic.version = 11 : i64} {
  func.func @deep_lstm_kernel(%arg0: i32, %arg1: memref<16x4xf32, #tpu.memory_space<vmem>>, %arg2: memref<4x128xf32, #tpu.memory_space<vmem>>, %arg3: memref<1x128xf32, #tpu.memory_space<vmem>>, %arg4: memref<128x64xf32, #tpu.memory_space<vmem>>, %arg5: memref<1x64xf32, #tpu.memory_space<vmem>>, %arg6: memref<64x4xf32, #tpu.memory_space<vmem>>, %arg7: memref<1x4xf32, #tpu.memory_space<vmem>>, %arg8: memref<32x128xf32, #tpu.memory_space<vmem>>, %arg9: memref<1x128xf32, #tpu.memory_space<vmem>>, %arg10: memref<128x64xf32, #tpu.memory_space<vmem>>, %arg11: memref<1x64xf32, #tpu.memory_space<vmem>>, %arg12: memref<64x4xf32, #tpu.memory_space<vmem>>, %arg13: memref<1x4xf32, #tpu.memory_space<vmem>>, %arg14: memref<32x1xf32, #tpu.memory_space<vmem>>, %arg15: memref<1x1xf32, #tpu.memory_space<vmem>>, %arg16: memref<1x16xf32, #tpu.memory_space<vmem>>, %arg17: memref<1x16xf32, #tpu.memory_space<vmem>>, %arg18: memref<16x1xf32, #tpu.memory_space<vmem>>, %arg19: memref<1x1xf32, #tpu.memory_space<vmem>>, %arg20: memref<2x1xf32, #tpu.memory_space<vmem>>, %arg21: memref<2x32xf32, #tpu.memory_space<vmem>>) attributes {dimension_semantics = [#tpu.dimension_semantics<arbitrary>], iteration_bounds = array<i64: 1>, scalar_prefetch = 0 : i64, scratch_operands = 0 : i64, tpu.core_type = #tpu.core_type<tc>, window_params = [{pipeline_mode = #tpu.pipeline_mode<synchronous>, transform_indices = @transform_0, window_bounds = array<i64: 16, 4>}, {pipeline_mode = #tpu.pipeline_mode<synchronous>, transform_indices = @transform_1, window_bounds = array<i64: 4, 128>}, {pipeline_mode = #tpu.pipeline_mode<synchronous>, transform_indices = @transform_2, window_bounds = array<i64: 1, 128>}, {pipeline_mode = #tpu.pipeline_mode<synchronous>, transform_indices = @transform_3, window_bounds = array<i64: 128, 64>}, {pipeline_mode = #tpu.pipeline_mode<synchronous>, transform_indices = @transform_4, window_bounds = array<i64: 1, 64>}, {pipeline_mode = #tpu.pipeline_mode<synchronous>, transform_indices = @transform_5, window_bounds = array<i64: 64, 4>}, {pipeline_mode = #tpu.pipeline_mode<synchronous>, transform_indices = @transform_6, window_bounds = array<i64: 1, 4>}, {pipeline_mode = #tpu.pipeline_mode<synchronous>, transform_indices = @transform_7, window_bounds = array<i64: 32, 128>}, {pipeline_mode = #tpu.pipeline_mode<synchronous>, transform_indices = @transform_8, window_bounds = array<i64: 1, 128>}, {pipeline_mode = #tpu.pipeline_mode<synchronous>, transform_indices = @transform_9, window_bounds = array<i64: 128, 64>}, {pipeline_mode = #tpu.pipeline_mode<synchronous>, transform_indices = @transform_10, window_bounds = array<i64: 1, 64>}, {pipeline_mode = #tpu.pipeline_mode<synchronous>, transform_indices = @transform_11, window_bounds = array<i64: 64, 4>}, {pipeline_mode = #tpu.pipeline_mode<synchronous>, transform_indices = @transform_12, window_bounds = array<i64: 1, 4>}, {pipeline_mode = #tpu.pipeline_mode<synchronous>, transform_indices = @transform_13, window_bounds = array<i64: 32, 1>}, {pipeline_mode = #tpu.pipeline_mode<synchronous>, transform_indices = @transform_14, window_bounds = array<i64: 1, 1>}, {pipeline_mode = #tpu.pipeline_mode<synchronous>, transform_indices = @transform_15, window_bounds = array<i64: 1, 16>}, {pipeline_mode = #tpu.pipeline_mode<synchronous>, transform_indices = @transform_16, window_bounds = array<i64: 1, 16>}, {pipeline_mode = #tpu.pipeline_mode<synchronous>, transform_indices = @transform_17, window_bounds = array<i64: 16, 1>}, {pipeline_mode = #tpu.pipeline_mode<synchronous>, transform_indices = @transform_18, window_bounds = array<i64: 1, 1>}, {pipeline_mode = #tpu.pipeline_mode<synchronous>, transform_indices = @transform_19, window_bounds = array<i64: 2, 1>}, {pipeline_mode = #tpu.pipeline_mode<synchronous>, transform_indices = @transform_20, window_bounds = array<i64: 2, 32>}]} {
    %c0 = arith.constant 0 : index
    %c0_0 = arith.constant 0 : index
    %0 = vector.load %arg1[%c0, %c0_0] : memref<16x4xf32, #tpu.memory_space<vmem>>, vector<16x4xf32>
    %c0_1 = arith.constant 0 : index
    %c0_2 = arith.constant 0 : index
    %1 = vector.load %arg2[%c0_1, %c0_2] : memref<4x128xf32, #tpu.memory_space<vmem>>, vector<4x128xf32>
    %cst = arith.constant dense<0.000000e+00> : vector<16x128xf32>
    %2 = tpu.matmul %0, %1, %cst {dimension_numbers = #tpu.dot_dimension_numbers<[1], [0], [0], [1], [0, 0, 1, 1], [], []>} : vector<16x4xf32>, vector<4x128xf32>, vector<16x128xf32> -> vector<16x128xf32>
    %c0_3 = arith.constant 0 : index
    %c0_4 = arith.constant 0 : index
    %3 = vector.load %arg3[%c0_3, %c0_4] : memref<1x128xf32, #tpu.memory_space<vmem>>, vector<1x128xf32>
    %4 = vector.broadcast %3 : vector<1x128xf32> to vector<16x128xf32>
    %5 = arith.addf %2, %4 : vector<16x128xf32>
    %cst_5 = arith.constant 0.000000e+00 : f32
    %6 = vector.broadcast %cst_5 : f32 to vector<16x128xf32>
    %7 = arith.maximumf %5, %6 : vector<16x128xf32>
    %c0_6 = arith.constant 0 : index
    %c0_7 = arith.constant 0 : index
    %8 = vector.load %arg4[%c0_6, %c0_7] : memref<128x64xf32, #tpu.memory_space<vmem>>, vector<128x64xf32>
    %cst_8 = arith.constant dense<0.000000e+00> : vector<16x64xf32>
    %9 = tpu.matmul %7, %8, %cst_8 {dimension_numbers = #tpu.dot_dimension_numbers<[1], [0], [0], [1], [0, 0, 1, 1], [], []>} : vector<16x128xf32>, vector<128x64xf32>, vector<16x64xf32> -> vector<16x64xf32>
    %c0_9 = arith.constant 0 : index
    %c0_10 = arith.constant 0 : index
    %10 = vector.load %arg5[%c0_9, %c0_10] : memref<1x64xf32, #tpu.memory_space<vmem>>, vector<1x64xf32>
    %11 = vector.broadcast %10 : vector<1x64xf32> to vector<16x64xf32>
    %12 = arith.addf %9, %11 : vector<16x64xf32>
    %cst_11 = arith.constant 0.000000e+00 : f32
    %13 = vector.broadcast %cst_11 : f32 to vector<16x64xf32>
    %14 = arith.maximumf %12, %13 : vector<16x64xf32>
    %c0_12 = arith.constant 0 : index
    %c0_13 = arith.constant 0 : index
    %15 = vector.load %arg6[%c0_12, %c0_13] : memref<64x4xf32, #tpu.memory_space<vmem>>, vector<64x4xf32>
    %cst_14 = arith.constant dense<0.000000e+00> : vector<16x4xf32>
    %16 = tpu.matmul %14, %15, %cst_14 {dimension_numbers = #tpu.dot_dimension_numbers<[1], [0], [0], [1], [0, 0, 1, 1], [], []>} : vector<16x64xf32>, vector<64x4xf32>, vector<16x4xf32> -> vector<16x4xf32>
    %c0_15 = arith.constant 0 : index
    %c0_16 = arith.constant 0 : index
    %17 = vector.load %arg7[%c0_15, %c0_16] : memref<1x4xf32, #tpu.memory_space<vmem>>, vector<1x4xf32>
    %18 = vector.broadcast %17 : vector<1x4xf32> to vector<16x4xf32>
    %19 = arith.addf %16, %18 : vector<16x4xf32>
    %20 = arith.negf %19 : vector<16x4xf32>
    %21 = math.exp %20 : vector<16x4xf32>
    %cst_17 = arith.constant 1.000000e+00 : f32
    %22 = vector.broadcast %cst_17 : f32 to vector<16x4xf32>
    %23 = arith.addf %22, %21 : vector<16x4xf32>
    %24 = arith.divf %22, %23 : vector<16x4xf32>
    %c0_18 = arith.constant 0 : index
    %c0_19 = arith.constant 0 : index
    %25 = vector.load %arg8[%c0_18, %c0_19] : memref<32x128xf32, #tpu.memory_space<vmem>>, vector<32x128xf32>
    %c0_20 = arith.constant 0 : index
    %c0_21 = arith.constant 0 : index
    %26 = vector.load %arg9[%c0_20, %c0_21] : memref<1x128xf32, #tpu.memory_space<vmem>>, vector<1x128xf32>
    %27 = vector.shape_cast %26 : vector<1x128xf32> to vector<1x128xf32>
    %28 = vector.broadcast %27 : vector<1x128xf32> to vector<2x128xf32>
    %c0_22 = arith.constant 0 : index
    %c0_23 = arith.constant 0 : index
    %29 = vector.load %arg11[%c0_22, %c0_23] : memref<1x64xf32, #tpu.memory_space<vmem>>, vector<1x64xf32>
    %30 = vector.shape_cast %29 : vector<1x64xf32> to vector<1x64xf32>
    %31 = vector.broadcast %30 : vector<1x64xf32> to vector<2x64xf32>
    %c0_24 = arith.constant 0 : index
    %c0_25 = arith.constant 0 : index
    %32 = vector.load %arg13[%c0_24, %c0_25] : memref<1x4xf32, #tpu.memory_space<vmem>>, vector<1x4xf32>
    %33 = vector.shape_cast %32 : vector<1x4xf32> to vector<1x4xf32>
    %34 = vector.broadcast %33 : vector<1x4xf32> to vector<2x4xf32>
    %35 = tpu.iota {dimensions = array<i32: 1>} : vector<2x4xi32>
    %c3_i32 = arith.constant 3 : i32
    %36 = vector.broadcast %c3_i32 : i32 to vector<2x4xi32>
    %37 = arith.cmpi eq, %35, %36 : vector<2x4xi32>
    %cst_26 = arith.constant 2.000000e+00 : f32
    %cst_27 = arith.constant 1.000000e+00 : f32
    %38 = vector.broadcast %cst_26 : f32 to vector<2x4xf32>
    %39 = vector.broadcast %cst_27 : f32 to vector<2x4xf32>
    %40 = arith.select %37, %38, %39 : vector<2x4xi1>, vector<2x4xf32>
    %cst_28 = arith.constant 0.000000e+00 : f32
    %41 = vector.broadcast %cst_28 : f32 to vector<2x32xf32>
    %cst_29 = arith.constant 0.000000e+00 : f32
    %42 = vector.broadcast %cst_29 : f32 to vector<2x32xf32>
    %43 = vector.extract_strided_slice %24 {offsets = [0, 0], sizes = [2, 4], strides = [1, 1]} : vector<16x4xf32> to vector<2x4xf32>
    %cst_30 = arith.constant dense<0.000000e+00> : vector<2x128xf32>
    %44 = tpu.matmul %41, %25, %cst_30 {dimension_numbers = #tpu.dot_dimension_numbers<[1], [0], [0], [1], [0, 0, 1, 1], [], []>} : vector<2x32xf32>, vector<32x128xf32>, vector<2x128xf32> -> vector<2x128xf32>
    %45 = arith.addf %44, %28 : vector<2x128xf32>
    %cst_31 = arith.constant 0.000000e+00 : f32
    %46 = vector.broadcast %cst_31 : f32 to vector<2x128xf32>
    %47 = arith.maximumf %45, %46 : vector<2x128xf32>
    %c0_32 = arith.constant 0 : index
    %c0_33 = arith.constant 0 : index
    %48 = vector.load %arg10[%c0_32, %c0_33] : memref<128x64xf32, #tpu.memory_space<vmem>>, vector<128x64xf32>
    %cst_34 = arith.constant dense<0.000000e+00> : vector<2x64xf32>
    %49 = tpu.matmul %47, %48, %cst_34 {dimension_numbers = #tpu.dot_dimension_numbers<[1], [0], [0], [1], [0, 0, 1, 1], [], []>} : vector<2x128xf32>, vector<128x64xf32>, vector<2x64xf32> -> vector<2x64xf32>
    %50 = arith.addf %49, %31 : vector<2x64xf32>
    %cst_35 = arith.constant 0.000000e+00 : f32
    %51 = vector.broadcast %cst_35 : f32 to vector<2x64xf32>
    %52 = arith.maximumf %50, %51 : vector<2x64xf32>
    %c0_36 = arith.constant 0 : index
    %c0_37 = arith.constant 0 : index
    %53 = vector.load %arg12[%c0_36, %c0_37] : memref<64x4xf32, #tpu.memory_space<vmem>>, vector<64x4xf32>
    %cst_38 = arith.constant dense<0.000000e+00> : vector<2x4xf32>
    %54 = tpu.matmul %52, %53, %cst_38 {dimension_numbers = #tpu.dot_dimension_numbers<[1], [0], [0], [1], [0, 0, 1, 1], [], []>} : vector<2x64xf32>, vector<64x4xf32>, vector<2x4xf32> -> vector<2x4xf32>
    %55 = arith.addf %54, %34 : vector<2x4xf32>
    %56 = arith.negf %55 : vector<2x4xf32>
    %57 = math.exp %56 : vector<2x4xf32>
    %cst_39 = arith.constant 1.000000e+00 : f32
    %58 = vector.broadcast %cst_39 : f32 to vector<2x4xf32>
    %59 = arith.addf %58, %57 : vector<2x4xf32>
    %60 = arith.divf %58, %59 : vector<2x4xf32>
    %61 = arith.addf %60, %43 : vector<2x4xf32>
    %62 = arith.mulf %61, %40 : vector<2x4xf32>
    %63 = arith.negf %62 : vector<2x4xf32>
    %64 = math.exp %63 : vector<2x4xf32>
    %cst_40 = arith.constant 1.000000e+00 : f32
    %65 = vector.broadcast %cst_40 : f32 to vector<2x4xf32>
    %66 = arith.addf %65, %64 : vector<2x4xf32>
    %67 = arith.divf %65, %66 : vector<2x4xf32>
    %68 = vector.extract_strided_slice %67 {offsets = [0, 0], sizes = [2, 1], strides = [1, 1]} : vector<2x4xf32> to vector<2x1xf32>
    %69 = vector.extract_strided_slice %67 {offsets = [0, 1], sizes = [2, 1], strides = [1, 1]} : vector<2x4xf32> to vector<2x1xf32>
    %70 = vector.extract_strided_slice %67 {offsets = [0, 2], sizes = [2, 1], strides = [1, 1]} : vector<2x4xf32> to vector<2x1xf32>
    %71 = vector.extract_strided_slice %67 {offsets = [0, 3], sizes = [2, 1], strides = [1, 1]} : vector<2x4xf32> to vector<2x1xf32>
    %cst_41 = arith.constant 2.000000e+00 : f32
    %72 = vector.broadcast %cst_41 : f32 to vector<2x1xf32>
    %73 = arith.mulf %72, %71 : vector<2x1xf32>
    %cst_42 = arith.constant 1.000000e+00 : f32
    %74 = vector.broadcast %cst_42 : f32 to vector<2x1xf32>
    %75 = arith.subf %73, %74 : vector<2x1xf32>
    %76 = vector.broadcast %68 : vector<2x1xf32> to vector<2x32xf32>
    %77 = arith.mulf %76, %42 : vector<2x32xf32>
    %78 = arith.mulf %69, %75 : vector<2x1xf32>
    %79 = vector.broadcast %78 : vector<2x1xf32> to vector<2x32xf32>
    %80 = arith.addf %77, %79 : vector<2x32xf32>
    %81 = math.tanh %80 : vector<2x32xf32>
    %82 = vector.broadcast %70 : vector<2x1xf32> to vector<2x32xf32>
    %83 = arith.mulf %82, %81 : vector<2x32xf32>
    %84 = vector.extract_strided_slice %24 {offsets = [2, 0], sizes = [2, 4], strides = [1, 1]} : vector<16x4xf32> to vector<2x4xf32>
    %cst_43 = arith.constant dense<0.000000e+00> : vector<2x128xf32>
    %85 = tpu.matmul %83, %25, %cst_43 {dimension_numbers = #tpu.dot_dimension_numbers<[1], [0], [0], [1], [0, 0, 1, 1], [], []>} : vector<2x32xf32>, vector<32x128xf32>, vector<2x128xf32> -> vector<2x128xf32>
    %86 = arith.addf %85, %28 : vector<2x128xf32>
    %cst_44 = arith.constant 0.000000e+00 : f32
    %87 = vector.broadcast %cst_44 : f32 to vector<2x128xf32>
    %88 = arith.maximumf %86, %87 : vector<2x128xf32>
    %c0_45 = arith.constant 0 : index
    %c0_46 = arith.constant 0 : index
    %89 = vector.load %arg10[%c0_45, %c0_46] : memref<128x64xf32, #tpu.memory_space<vmem>>, vector<128x64xf32>
    %cst_47 = arith.constant dense<0.000000e+00> : vector<2x64xf32>
    %90 = tpu.matmul %88, %89, %cst_47 {dimension_numbers = #tpu.dot_dimension_numbers<[1], [0], [0], [1], [0, 0, 1, 1], [], []>} : vector<2x128xf32>, vector<128x64xf32>, vector<2x64xf32> -> vector<2x64xf32>
    %91 = arith.addf %90, %31 : vector<2x64xf32>
    %cst_48 = arith.constant 0.000000e+00 : f32
    %92 = vector.broadcast %cst_48 : f32 to vector<2x64xf32>
    %93 = arith.maximumf %91, %92 : vector<2x64xf32>
    %c0_49 = arith.constant 0 : index
    %c0_50 = arith.constant 0 : index
    %94 = vector.load %arg12[%c0_49, %c0_50] : memref<64x4xf32, #tpu.memory_space<vmem>>, vector<64x4xf32>
    %cst_51 = arith.constant dense<0.000000e+00> : vector<2x4xf32>
    %95 = tpu.matmul %93, %94, %cst_51 {dimension_numbers = #tpu.dot_dimension_numbers<[1], [0], [0], [1], [0, 0, 1, 1], [], []>} : vector<2x64xf32>, vector<64x4xf32>, vector<2x4xf32> -> vector<2x4xf32>
    %96 = arith.addf %95, %34 : vector<2x4xf32>
    %97 = arith.negf %96 : vector<2x4xf32>
    %98 = math.exp %97 : vector<2x4xf32>
    %cst_52 = arith.constant 1.000000e+00 : f32
    %99 = vector.broadcast %cst_52 : f32 to vector<2x4xf32>
    %100 = arith.addf %99, %98 : vector<2x4xf32>
    %101 = arith.divf %99, %100 : vector<2x4xf32>
    %102 = arith.addf %101, %84 : vector<2x4xf32>
    %103 = arith.mulf %102, %40 : vector<2x4xf32>
    %104 = arith.negf %103 : vector<2x4xf32>
    %105 = math.exp %104 : vector<2x4xf32>
    %cst_53 = arith.constant 1.000000e+00 : f32
    %106 = vector.broadcast %cst_53 : f32 to vector<2x4xf32>
    %107 = arith.addf %106, %105 : vector<2x4xf32>
    %108 = arith.divf %106, %107 : vector<2x4xf32>
    %109 = vector.extract_strided_slice %108 {offsets = [0, 0], sizes = [2, 1], strides = [1, 1]} : vector<2x4xf32> to vector<2x1xf32>
    %110 = vector.extract_strided_slice %108 {offsets = [0, 1], sizes = [2, 1], strides = [1, 1]} : vector<2x4xf32> to vector<2x1xf32>
    %111 = vector.extract_strided_slice %108 {offsets = [0, 2], sizes = [2, 1], strides = [1, 1]} : vector<2x4xf32> to vector<2x1xf32>
    %112 = vector.extract_strided_slice %108 {offsets = [0, 3], sizes = [2, 1], strides = [1, 1]} : vector<2x4xf32> to vector<2x1xf32>
    %cst_54 = arith.constant 2.000000e+00 : f32
    %113 = vector.broadcast %cst_54 : f32 to vector<2x1xf32>
    %114 = arith.mulf %113, %112 : vector<2x1xf32>
    %cst_55 = arith.constant 1.000000e+00 : f32
    %115 = vector.broadcast %cst_55 : f32 to vector<2x1xf32>
    %116 = arith.subf %114, %115 : vector<2x1xf32>
    %117 = vector.broadcast %109 : vector<2x1xf32> to vector<2x32xf32>
    %118 = arith.mulf %117, %80 : vector<2x32xf32>
    %119 = arith.mulf %110, %116 : vector<2x1xf32>
    %120 = vector.broadcast %119 : vector<2x1xf32> to vector<2x32xf32>
    %121 = arith.addf %118, %120 : vector<2x32xf32>
    %122 = math.tanh %121 : vector<2x32xf32>
    %123 = vector.broadcast %111 : vector<2x1xf32> to vector<2x32xf32>
    %124 = arith.mulf %123, %122 : vector<2x32xf32>
    %125 = vector.extract_strided_slice %24 {offsets = [4, 0], sizes = [2, 4], strides = [1, 1]} : vector<16x4xf32> to vector<2x4xf32>
    %cst_56 = arith.constant dense<0.000000e+00> : vector<2x128xf32>
    %126 = tpu.matmul %124, %25, %cst_56 {dimension_numbers = #tpu.dot_dimension_numbers<[1], [0], [0], [1], [0, 0, 1, 1], [], []>} : vector<2x32xf32>, vector<32x128xf32>, vector<2x128xf32> -> vector<2x128xf32>
    %127 = arith.addf %126, %28 : vector<2x128xf32>
    %cst_57 = arith.constant 0.000000e+00 : f32
    %128 = vector.broadcast %cst_57 : f32 to vector<2x128xf32>
    %129 = arith.maximumf %127, %128 : vector<2x128xf32>
    %c0_58 = arith.constant 0 : index
    %c0_59 = arith.constant 0 : index
    %130 = vector.load %arg10[%c0_58, %c0_59] : memref<128x64xf32, #tpu.memory_space<vmem>>, vector<128x64xf32>
    %cst_60 = arith.constant dense<0.000000e+00> : vector<2x64xf32>
    %131 = tpu.matmul %129, %130, %cst_60 {dimension_numbers = #tpu.dot_dimension_numbers<[1], [0], [0], [1], [0, 0, 1, 1], [], []>} : vector<2x128xf32>, vector<128x64xf32>, vector<2x64xf32> -> vector<2x64xf32>
    %132 = arith.addf %131, %31 : vector<2x64xf32>
    %cst_61 = arith.constant 0.000000e+00 : f32
    %133 = vector.broadcast %cst_61 : f32 to vector<2x64xf32>
    %134 = arith.maximumf %132, %133 : vector<2x64xf32>
    %c0_62 = arith.constant 0 : index
    %c0_63 = arith.constant 0 : index
    %135 = vector.load %arg12[%c0_62, %c0_63] : memref<64x4xf32, #tpu.memory_space<vmem>>, vector<64x4xf32>
    %cst_64 = arith.constant dense<0.000000e+00> : vector<2x4xf32>
    %136 = tpu.matmul %134, %135, %cst_64 {dimension_numbers = #tpu.dot_dimension_numbers<[1], [0], [0], [1], [0, 0, 1, 1], [], []>} : vector<2x64xf32>, vector<64x4xf32>, vector<2x4xf32> -> vector<2x4xf32>
    %137 = arith.addf %136, %34 : vector<2x4xf32>
    %138 = arith.negf %137 : vector<2x4xf32>
    %139 = math.exp %138 : vector<2x4xf32>
    %cst_65 = arith.constant 1.000000e+00 : f32
    %140 = vector.broadcast %cst_65 : f32 to vector<2x4xf32>
    %141 = arith.addf %140, %139 : vector<2x4xf32>
    %142 = arith.divf %140, %141 : vector<2x4xf32>
    %143 = arith.addf %142, %125 : vector<2x4xf32>
    %144 = arith.mulf %143, %40 : vector<2x4xf32>
    %145 = arith.negf %144 : vector<2x4xf32>
    %146 = math.exp %145 : vector<2x4xf32>
    %cst_66 = arith.constant 1.000000e+00 : f32
    %147 = vector.broadcast %cst_66 : f32 to vector<2x4xf32>
    %148 = arith.addf %147, %146 : vector<2x4xf32>
    %149 = arith.divf %147, %148 : vector<2x4xf32>
    %150 = vector.extract_strided_slice %149 {offsets = [0, 0], sizes = [2, 1], strides = [1, 1]} : vector<2x4xf32> to vector<2x1xf32>
    %151 = vector.extract_strided_slice %149 {offsets = [0, 1], sizes = [2, 1], strides = [1, 1]} : vector<2x4xf32> to vector<2x1xf32>
    %152 = vector.extract_strided_slice %149 {offsets = [0, 2], sizes = [2, 1], strides = [1, 1]} : vector<2x4xf32> to vector<2x1xf32>
    %153 = vector.extract_strided_slice %149 {offsets = [0, 3], sizes = [2, 1], strides = [1, 1]} : vector<2x4xf32> to vector<2x1xf32>
    %cst_67 = arith.constant 2.000000e+00 : f32
    %154 = vector.broadcast %cst_67 : f32 to vector<2x1xf32>
    %155 = arith.mulf %154, %153 : vector<2x1xf32>
    %cst_68 = arith.constant 1.000000e+00 : f32
    %156 = vector.broadcast %cst_68 : f32 to vector<2x1xf32>
    %157 = arith.subf %155, %156 : vector<2x1xf32>
    %158 = vector.broadcast %150 : vector<2x1xf32> to vector<2x32xf32>
    %159 = arith.mulf %158, %121 : vector<2x32xf32>
    %160 = arith.mulf %151, %157 : vector<2x1xf32>
    %161 = vector.broadcast %160 : vector<2x1xf32> to vector<2x32xf32>
    %162 = arith.addf %159, %161 : vector<2x32xf32>
    %163 = math.tanh %162 : vector<2x32xf32>
    %164 = vector.broadcast %152 : vector<2x1xf32> to vector<2x32xf32>
    %165 = arith.mulf %164, %163 : vector<2x32xf32>
    %166 = vector.extract_strided_slice %24 {offsets = [6, 0], sizes = [2, 4], strides = [1, 1]} : vector<16x4xf32> to vector<2x4xf32>
    %cst_69 = arith.constant dense<0.000000e+00> : vector<2x128xf32>
    %167 = tpu.matmul %165, %25, %cst_69 {dimension_numbers = #tpu.dot_dimension_numbers<[1], [0], [0], [1], [0, 0, 1, 1], [], []>} : vector<2x32xf32>, vector<32x128xf32>, vector<2x128xf32> -> vector<2x128xf32>
    %168 = arith.addf %167, %28 : vector<2x128xf32>
    %cst_70 = arith.constant 0.000000e+00 : f32
    %169 = vector.broadcast %cst_70 : f32 to vector<2x128xf32>
    %170 = arith.maximumf %168, %169 : vector<2x128xf32>
    %c0_71 = arith.constant 0 : index
    %c0_72 = arith.constant 0 : index
    %171 = vector.load %arg10[%c0_71, %c0_72] : memref<128x64xf32, #tpu.memory_space<vmem>>, vector<128x64xf32>
    %cst_73 = arith.constant dense<0.000000e+00> : vector<2x64xf32>
    %172 = tpu.matmul %170, %171, %cst_73 {dimension_numbers = #tpu.dot_dimension_numbers<[1], [0], [0], [1], [0, 0, 1, 1], [], []>} : vector<2x128xf32>, vector<128x64xf32>, vector<2x64xf32> -> vector<2x64xf32>
    %173 = arith.addf %172, %31 : vector<2x64xf32>
    %cst_74 = arith.constant 0.000000e+00 : f32
    %174 = vector.broadcast %cst_74 : f32 to vector<2x64xf32>
    %175 = arith.maximumf %173, %174 : vector<2x64xf32>
    %c0_75 = arith.constant 0 : index
    %c0_76 = arith.constant 0 : index
    %176 = vector.load %arg12[%c0_75, %c0_76] : memref<64x4xf32, #tpu.memory_space<vmem>>, vector<64x4xf32>
    %cst_77 = arith.constant dense<0.000000e+00> : vector<2x4xf32>
    %177 = tpu.matmul %175, %176, %cst_77 {dimension_numbers = #tpu.dot_dimension_numbers<[1], [0], [0], [1], [0, 0, 1, 1], [], []>} : vector<2x64xf32>, vector<64x4xf32>, vector<2x4xf32> -> vector<2x4xf32>
    %178 = arith.addf %177, %34 : vector<2x4xf32>
    %179 = arith.negf %178 : vector<2x4xf32>
    %180 = math.exp %179 : vector<2x4xf32>
    %cst_78 = arith.constant 1.000000e+00 : f32
    %181 = vector.broadcast %cst_78 : f32 to vector<2x4xf32>
    %182 = arith.addf %181, %180 : vector<2x4xf32>
    %183 = arith.divf %181, %182 : vector<2x4xf32>
    %184 = arith.addf %183, %166 : vector<2x4xf32>
    %185 = arith.mulf %184, %40 : vector<2x4xf32>
    %186 = arith.negf %185 : vector<2x4xf32>
    %187 = math.exp %186 : vector<2x4xf32>
    %cst_79 = arith.constant 1.000000e+00 : f32
    %188 = vector.broadcast %cst_79 : f32 to vector<2x4xf32>
    %189 = arith.addf %188, %187 : vector<2x4xf32>
    %190 = arith.divf %188, %189 : vector<2x4xf32>
    %191 = vector.extract_strided_slice %190 {offsets = [0, 0], sizes = [2, 1], strides = [1, 1]} : vector<2x4xf32> to vector<2x1xf32>
    %192 = vector.extract_strided_slice %190 {offsets = [0, 1], sizes = [2, 1], strides = [1, 1]} : vector<2x4xf32> to vector<2x1xf32>
    %193 = vector.extract_strided_slice %190 {offsets = [0, 2], sizes = [2, 1], strides = [1, 1]} : vector<2x4xf32> to vector<2x1xf32>
    %194 = vector.extract_strided_slice %190 {offsets = [0, 3], sizes = [2, 1], strides = [1, 1]} : vector<2x4xf32> to vector<2x1xf32>
    %cst_80 = arith.constant 2.000000e+00 : f32
    %195 = vector.broadcast %cst_80 : f32 to vector<2x1xf32>
    %196 = arith.mulf %195, %194 : vector<2x1xf32>
    %cst_81 = arith.constant 1.000000e+00 : f32
    %197 = vector.broadcast %cst_81 : f32 to vector<2x1xf32>
    %198 = arith.subf %196, %197 : vector<2x1xf32>
    %199 = vector.broadcast %191 : vector<2x1xf32> to vector<2x32xf32>
    %200 = arith.mulf %199, %162 : vector<2x32xf32>
    %201 = arith.mulf %192, %198 : vector<2x1xf32>
    %202 = vector.broadcast %201 : vector<2x1xf32> to vector<2x32xf32>
    %203 = arith.addf %200, %202 : vector<2x32xf32>
    %204 = math.tanh %203 : vector<2x32xf32>
    %205 = vector.broadcast %193 : vector<2x1xf32> to vector<2x32xf32>
    %206 = arith.mulf %205, %204 : vector<2x32xf32>
    %207 = vector.extract_strided_slice %24 {offsets = [8, 0], sizes = [2, 4], strides = [1, 1]} : vector<16x4xf32> to vector<2x4xf32>
    %cst_82 = arith.constant dense<0.000000e+00> : vector<2x128xf32>
    %208 = tpu.matmul %206, %25, %cst_82 {dimension_numbers = #tpu.dot_dimension_numbers<[1], [0], [0], [1], [0, 0, 1, 1], [], []>} : vector<2x32xf32>, vector<32x128xf32>, vector<2x128xf32> -> vector<2x128xf32>
    %209 = arith.addf %208, %28 : vector<2x128xf32>
    %cst_83 = arith.constant 0.000000e+00 : f32
    %210 = vector.broadcast %cst_83 : f32 to vector<2x128xf32>
    %211 = arith.maximumf %209, %210 : vector<2x128xf32>
    %c0_84 = arith.constant 0 : index
    %c0_85 = arith.constant 0 : index
    %212 = vector.load %arg10[%c0_84, %c0_85] : memref<128x64xf32, #tpu.memory_space<vmem>>, vector<128x64xf32>
    %cst_86 = arith.constant dense<0.000000e+00> : vector<2x64xf32>
    %213 = tpu.matmul %211, %212, %cst_86 {dimension_numbers = #tpu.dot_dimension_numbers<[1], [0], [0], [1], [0, 0, 1, 1], [], []>} : vector<2x128xf32>, vector<128x64xf32>, vector<2x64xf32> -> vector<2x64xf32>
    %214 = arith.addf %213, %31 : vector<2x64xf32>
    %cst_87 = arith.constant 0.000000e+00 : f32
    %215 = vector.broadcast %cst_87 : f32 to vector<2x64xf32>
    %216 = arith.maximumf %214, %215 : vector<2x64xf32>
    %c0_88 = arith.constant 0 : index
    %c0_89 = arith.constant 0 : index
    %217 = vector.load %arg12[%c0_88, %c0_89] : memref<64x4xf32, #tpu.memory_space<vmem>>, vector<64x4xf32>
    %cst_90 = arith.constant dense<0.000000e+00> : vector<2x4xf32>
    %218 = tpu.matmul %216, %217, %cst_90 {dimension_numbers = #tpu.dot_dimension_numbers<[1], [0], [0], [1], [0, 0, 1, 1], [], []>} : vector<2x64xf32>, vector<64x4xf32>, vector<2x4xf32> -> vector<2x4xf32>
    %219 = arith.addf %218, %34 : vector<2x4xf32>
    %220 = arith.negf %219 : vector<2x4xf32>
    %221 = math.exp %220 : vector<2x4xf32>
    %cst_91 = arith.constant 1.000000e+00 : f32
    %222 = vector.broadcast %cst_91 : f32 to vector<2x4xf32>
    %223 = arith.addf %222, %221 : vector<2x4xf32>
    %224 = arith.divf %222, %223 : vector<2x4xf32>
    %225 = arith.addf %224, %207 : vector<2x4xf32>
    %226 = arith.mulf %225, %40 : vector<2x4xf32>
    %227 = arith.negf %226 : vector<2x4xf32>
    %228 = math.exp %227 : vector<2x4xf32>
    %cst_92 = arith.constant 1.000000e+00 : f32
    %229 = vector.broadcast %cst_92 : f32 to vector<2x4xf32>
    %230 = arith.addf %229, %228 : vector<2x4xf32>
    %231 = arith.divf %229, %230 : vector<2x4xf32>
    %232 = vector.extract_strided_slice %231 {offsets = [0, 0], sizes = [2, 1], strides = [1, 1]} : vector<2x4xf32> to vector<2x1xf32>
    %233 = vector.extract_strided_slice %231 {offsets = [0, 1], sizes = [2, 1], strides = [1, 1]} : vector<2x4xf32> to vector<2x1xf32>
    %234 = vector.extract_strided_slice %231 {offsets = [0, 2], sizes = [2, 1], strides = [1, 1]} : vector<2x4xf32> to vector<2x1xf32>
    %235 = vector.extract_strided_slice %231 {offsets = [0, 3], sizes = [2, 1], strides = [1, 1]} : vector<2x4xf32> to vector<2x1xf32>
    %cst_93 = arith.constant 2.000000e+00 : f32
    %236 = vector.broadcast %cst_93 : f32 to vector<2x1xf32>
    %237 = arith.mulf %236, %235 : vector<2x1xf32>
    %cst_94 = arith.constant 1.000000e+00 : f32
    %238 = vector.broadcast %cst_94 : f32 to vector<2x1xf32>
    %239 = arith.subf %237, %238 : vector<2x1xf32>
    %240 = vector.broadcast %232 : vector<2x1xf32> to vector<2x32xf32>
    %241 = arith.mulf %240, %203 : vector<2x32xf32>
    %242 = arith.mulf %233, %239 : vector<2x1xf32>
    %243 = vector.broadcast %242 : vector<2x1xf32> to vector<2x32xf32>
    %244 = arith.addf %241, %243 : vector<2x32xf32>
    %245 = math.tanh %244 : vector<2x32xf32>
    %246 = vector.broadcast %234 : vector<2x1xf32> to vector<2x32xf32>
    %247 = arith.mulf %246, %245 : vector<2x32xf32>
    %248 = vector.extract_strided_slice %24 {offsets = [10, 0], sizes = [2, 4], strides = [1, 1]} : vector<16x4xf32> to vector<2x4xf32>
    %cst_95 = arith.constant dense<0.000000e+00> : vector<2x128xf32>
    %249 = tpu.matmul %247, %25, %cst_95 {dimension_numbers = #tpu.dot_dimension_numbers<[1], [0], [0], [1], [0, 0, 1, 1], [], []>} : vector<2x32xf32>, vector<32x128xf32>, vector<2x128xf32> -> vector<2x128xf32>
    %250 = arith.addf %249, %28 : vector<2x128xf32>
    %cst_96 = arith.constant 0.000000e+00 : f32
    %251 = vector.broadcast %cst_96 : f32 to vector<2x128xf32>
    %252 = arith.maximumf %250, %251 : vector<2x128xf32>
    %c0_97 = arith.constant 0 : index
    %c0_98 = arith.constant 0 : index
    %253 = vector.load %arg10[%c0_97, %c0_98] : memref<128x64xf32, #tpu.memory_space<vmem>>, vector<128x64xf32>
    %cst_99 = arith.constant dense<0.000000e+00> : vector<2x64xf32>
    %254 = tpu.matmul %252, %253, %cst_99 {dimension_numbers = #tpu.dot_dimension_numbers<[1], [0], [0], [1], [0, 0, 1, 1], [], []>} : vector<2x128xf32>, vector<128x64xf32>, vector<2x64xf32> -> vector<2x64xf32>
    %255 = arith.addf %254, %31 : vector<2x64xf32>
    %cst_100 = arith.constant 0.000000e+00 : f32
    %256 = vector.broadcast %cst_100 : f32 to vector<2x64xf32>
    %257 = arith.maximumf %255, %256 : vector<2x64xf32>
    %c0_101 = arith.constant 0 : index
    %c0_102 = arith.constant 0 : index
    %258 = vector.load %arg12[%c0_101, %c0_102] : memref<64x4xf32, #tpu.memory_space<vmem>>, vector<64x4xf32>
    %cst_103 = arith.constant dense<0.000000e+00> : vector<2x4xf32>
    %259 = tpu.matmul %257, %258, %cst_103 {dimension_numbers = #tpu.dot_dimension_numbers<[1], [0], [0], [1], [0, 0, 1, 1], [], []>} : vector<2x64xf32>, vector<64x4xf32>, vector<2x4xf32> -> vector<2x4xf32>
    %260 = arith.addf %259, %34 : vector<2x4xf32>
    %261 = arith.negf %260 : vector<2x4xf32>
    %262 = math.exp %261 : vector<2x4xf32>
    %cst_104 = arith.constant 1.000000e+00 : f32
    %263 = vector.broadcast %cst_104 : f32 to vector<2x4xf32>
    %264 = arith.addf %263, %262 : vector<2x4xf32>
    %265 = arith.divf %263, %264 : vector<2x4xf32>
    %266 = arith.addf %265, %248 : vector<2x4xf32>
    %267 = arith.mulf %266, %40 : vector<2x4xf32>
    %268 = arith.negf %267 : vector<2x4xf32>
    %269 = math.exp %268 : vector<2x4xf32>
    %cst_105 = arith.constant 1.000000e+00 : f32
    %270 = vector.broadcast %cst_105 : f32 to vector<2x4xf32>
    %271 = arith.addf %270, %269 : vector<2x4xf32>
    %272 = arith.divf %270, %271 : vector<2x4xf32>
    %273 = vector.extract_strided_slice %272 {offsets = [0, 0], sizes = [2, 1], strides = [1, 1]} : vector<2x4xf32> to vector<2x1xf32>
    %274 = vector.extract_strided_slice %272 {offsets = [0, 1], sizes = [2, 1], strides = [1, 1]} : vector<2x4xf32> to vector<2x1xf32>
    %275 = vector.extract_strided_slice %272 {offsets = [0, 2], sizes = [2, 1], strides = [1, 1]} : vector<2x4xf32> to vector<2x1xf32>
    %276 = vector.extract_strided_slice %272 {offsets = [0, 3], sizes = [2, 1], strides = [1, 1]} : vector<2x4xf32> to vector<2x1xf32>
    %cst_106 = arith.constant 2.000000e+00 : f32
    %277 = vector.broadcast %cst_106 : f32 to vector<2x1xf32>
    %278 = arith.mulf %277, %276 : vector<2x1xf32>
    %cst_107 = arith.constant 1.000000e+00 : f32
    %279 = vector.broadcast %cst_107 : f32 to vector<2x1xf32>
    %280 = arith.subf %278, %279 : vector<2x1xf32>
    %281 = vector.broadcast %273 : vector<2x1xf32> to vector<2x32xf32>
    %282 = arith.mulf %281, %244 : vector<2x32xf32>
    %283 = arith.mulf %274, %280 : vector<2x1xf32>
    %284 = vector.broadcast %283 : vector<2x1xf32> to vector<2x32xf32>
    %285 = arith.addf %282, %284 : vector<2x32xf32>
    %286 = math.tanh %285 : vector<2x32xf32>
    %287 = vector.broadcast %275 : vector<2x1xf32> to vector<2x32xf32>
    %288 = arith.mulf %287, %286 : vector<2x32xf32>
    %289 = vector.extract_strided_slice %24 {offsets = [12, 0], sizes = [2, 4], strides = [1, 1]} : vector<16x4xf32> to vector<2x4xf32>
    %cst_108 = arith.constant dense<0.000000e+00> : vector<2x128xf32>
    %290 = tpu.matmul %288, %25, %cst_108 {dimension_numbers = #tpu.dot_dimension_numbers<[1], [0], [0], [1], [0, 0, 1, 1], [], []>} : vector<2x32xf32>, vector<32x128xf32>, vector<2x128xf32> -> vector<2x128xf32>
    %291 = arith.addf %290, %28 : vector<2x128xf32>
    %cst_109 = arith.constant 0.000000e+00 : f32
    %292 = vector.broadcast %cst_109 : f32 to vector<2x128xf32>
    %293 = arith.maximumf %291, %292 : vector<2x128xf32>
    %c0_110 = arith.constant 0 : index
    %c0_111 = arith.constant 0 : index
    %294 = vector.load %arg10[%c0_110, %c0_111] : memref<128x64xf32, #tpu.memory_space<vmem>>, vector<128x64xf32>
    %cst_112 = arith.constant dense<0.000000e+00> : vector<2x64xf32>
    %295 = tpu.matmul %293, %294, %cst_112 {dimension_numbers = #tpu.dot_dimension_numbers<[1], [0], [0], [1], [0, 0, 1, 1], [], []>} : vector<2x128xf32>, vector<128x64xf32>, vector<2x64xf32> -> vector<2x64xf32>
    %296 = arith.addf %295, %31 : vector<2x64xf32>
    %cst_113 = arith.constant 0.000000e+00 : f32
    %297 = vector.broadcast %cst_113 : f32 to vector<2x64xf32>
    %298 = arith.maximumf %296, %297 : vector<2x64xf32>
    %c0_114 = arith.constant 0 : index
    %c0_115 = arith.constant 0 : index
    %299 = vector.load %arg12[%c0_114, %c0_115] : memref<64x4xf32, #tpu.memory_space<vmem>>, vector<64x4xf32>
    %cst_116 = arith.constant dense<0.000000e+00> : vector<2x4xf32>
    %300 = tpu.matmul %298, %299, %cst_116 {dimension_numbers = #tpu.dot_dimension_numbers<[1], [0], [0], [1], [0, 0, 1, 1], [], []>} : vector<2x64xf32>, vector<64x4xf32>, vector<2x4xf32> -> vector<2x4xf32>
    %301 = arith.addf %300, %34 : vector<2x4xf32>
    %302 = arith.negf %301 : vector<2x4xf32>
    %303 = math.exp %302 : vector<2x4xf32>
    %cst_117 = arith.constant 1.000000e+00 : f32
    %304 = vector.broadcast %cst_117 : f32 to vector<2x4xf32>
    %305 = arith.addf %304, %303 : vector<2x4xf32>
    %306 = arith.divf %304, %305 : vector<2x4xf32>
    %307 = arith.addf %306, %289 : vector<2x4xf32>
    %308 = arith.mulf %307, %40 : vector<2x4xf32>
    %309 = arith.negf %308 : vector<2x4xf32>
    %310 = math.exp %309 : vector<2x4xf32>
    %cst_118 = arith.constant 1.000000e+00 : f32
    %311 = vector.broadcast %cst_118 : f32 to vector<2x4xf32>
    %312 = arith.addf %311, %310 : vector<2x4xf32>
    %313 = arith.divf %311, %312 : vector<2x4xf32>
    %314 = vector.extract_strided_slice %313 {offsets = [0, 0], sizes = [2, 1], strides = [1, 1]} : vector<2x4xf32> to vector<2x1xf32>
    %315 = vector.extract_strided_slice %313 {offsets = [0, 1], sizes = [2, 1], strides = [1, 1]} : vector<2x4xf32> to vector<2x1xf32>
    %316 = vector.extract_strided_slice %313 {offsets = [0, 2], sizes = [2, 1], strides = [1, 1]} : vector<2x4xf32> to vector<2x1xf32>
    %317 = vector.extract_strided_slice %313 {offsets = [0, 3], sizes = [2, 1], strides = [1, 1]} : vector<2x4xf32> to vector<2x1xf32>
    %cst_119 = arith.constant 2.000000e+00 : f32
    %318 = vector.broadcast %cst_119 : f32 to vector<2x1xf32>
    %319 = arith.mulf %318, %317 : vector<2x1xf32>
    %cst_120 = arith.constant 1.000000e+00 : f32
    %320 = vector.broadcast %cst_120 : f32 to vector<2x1xf32>
    %321 = arith.subf %319, %320 : vector<2x1xf32>
    %322 = vector.broadcast %314 : vector<2x1xf32> to vector<2x32xf32>
    %323 = arith.mulf %322, %285 : vector<2x32xf32>
    %324 = arith.mulf %315, %321 : vector<2x1xf32>
    %325 = vector.broadcast %324 : vector<2x1xf32> to vector<2x32xf32>
    %326 = arith.addf %323, %325 : vector<2x32xf32>
    %327 = math.tanh %326 : vector<2x32xf32>
    %328 = vector.broadcast %316 : vector<2x1xf32> to vector<2x32xf32>
    %329 = arith.mulf %328, %327 : vector<2x32xf32>
    %330 = vector.extract_strided_slice %24 {offsets = [14, 0], sizes = [2, 4], strides = [1, 1]} : vector<16x4xf32> to vector<2x4xf32>
    %cst_121 = arith.constant dense<0.000000e+00> : vector<2x128xf32>
    %331 = tpu.matmul %329, %25, %cst_121 {dimension_numbers = #tpu.dot_dimension_numbers<[1], [0], [0], [1], [0, 0, 1, 1], [], []>} : vector<2x32xf32>, vector<32x128xf32>, vector<2x128xf32> -> vector<2x128xf32>
    %332 = arith.addf %331, %28 : vector<2x128xf32>
    %cst_122 = arith.constant 0.000000e+00 : f32
    %333 = vector.broadcast %cst_122 : f32 to vector<2x128xf32>
    %334 = arith.maximumf %332, %333 : vector<2x128xf32>
    %c0_123 = arith.constant 0 : index
    %c0_124 = arith.constant 0 : index
    %335 = vector.load %arg10[%c0_123, %c0_124] : memref<128x64xf32, #tpu.memory_space<vmem>>, vector<128x64xf32>
    %cst_125 = arith.constant dense<0.000000e+00> : vector<2x64xf32>
    %336 = tpu.matmul %334, %335, %cst_125 {dimension_numbers = #tpu.dot_dimension_numbers<[1], [0], [0], [1], [0, 0, 1, 1], [], []>} : vector<2x128xf32>, vector<128x64xf32>, vector<2x64xf32> -> vector<2x64xf32>
    %337 = arith.addf %336, %31 : vector<2x64xf32>
    %cst_126 = arith.constant 0.000000e+00 : f32
    %338 = vector.broadcast %cst_126 : f32 to vector<2x64xf32>
    %339 = arith.maximumf %337, %338 : vector<2x64xf32>
    %c0_127 = arith.constant 0 : index
    %c0_128 = arith.constant 0 : index
    %340 = vector.load %arg12[%c0_127, %c0_128] : memref<64x4xf32, #tpu.memory_space<vmem>>, vector<64x4xf32>
    %cst_129 = arith.constant dense<0.000000e+00> : vector<2x4xf32>
    %341 = tpu.matmul %339, %340, %cst_129 {dimension_numbers = #tpu.dot_dimension_numbers<[1], [0], [0], [1], [0, 0, 1, 1], [], []>} : vector<2x64xf32>, vector<64x4xf32>, vector<2x4xf32> -> vector<2x4xf32>
    %342 = arith.addf %341, %34 : vector<2x4xf32>
    %343 = arith.negf %342 : vector<2x4xf32>
    %344 = math.exp %343 : vector<2x4xf32>
    %cst_130 = arith.constant 1.000000e+00 : f32
    %345 = vector.broadcast %cst_130 : f32 to vector<2x4xf32>
    %346 = arith.addf %345, %344 : vector<2x4xf32>
    %347 = arith.divf %345, %346 : vector<2x4xf32>
    %348 = arith.addf %347, %330 : vector<2x4xf32>
    %349 = arith.mulf %348, %40 : vector<2x4xf32>
    %350 = arith.negf %349 : vector<2x4xf32>
    %351 = math.exp %350 : vector<2x4xf32>
    %cst_131 = arith.constant 1.000000e+00 : f32
    %352 = vector.broadcast %cst_131 : f32 to vector<2x4xf32>
    %353 = arith.addf %352, %351 : vector<2x4xf32>
    %354 = arith.divf %352, %353 : vector<2x4xf32>
    %355 = vector.extract_strided_slice %354 {offsets = [0, 0], sizes = [2, 1], strides = [1, 1]} : vector<2x4xf32> to vector<2x1xf32>
    %356 = vector.extract_strided_slice %354 {offsets = [0, 1], sizes = [2, 1], strides = [1, 1]} : vector<2x4xf32> to vector<2x1xf32>
    %357 = vector.extract_strided_slice %354 {offsets = [0, 2], sizes = [2, 1], strides = [1, 1]} : vector<2x4xf32> to vector<2x1xf32>
    %358 = vector.extract_strided_slice %354 {offsets = [0, 3], sizes = [2, 1], strides = [1, 1]} : vector<2x4xf32> to vector<2x1xf32>
    %cst_132 = arith.constant 2.000000e+00 : f32
    %359 = vector.broadcast %cst_132 : f32 to vector<2x1xf32>
    %360 = arith.mulf %359, %358 : vector<2x1xf32>
    %cst_133 = arith.constant 1.000000e+00 : f32
    %361 = vector.broadcast %cst_133 : f32 to vector<2x1xf32>
    %362 = arith.subf %360, %361 : vector<2x1xf32>
    %363 = vector.broadcast %355 : vector<2x1xf32> to vector<2x32xf32>
    %364 = arith.mulf %363, %326 : vector<2x32xf32>
    %365 = arith.mulf %356, %362 : vector<2x1xf32>
    %366 = vector.broadcast %365 : vector<2x1xf32> to vector<2x32xf32>
    %367 = arith.addf %364, %366 : vector<2x32xf32>
    %368 = math.tanh %367 : vector<2x32xf32>
    %369 = vector.broadcast %357 : vector<2x1xf32> to vector<2x32xf32>
    %370 = arith.mulf %369, %368 : vector<2x32xf32>
    %c0_134 = arith.constant 0 : index
    %c0_135 = arith.constant 0 : index
    %371 = vector.load %arg14[%c0_134, %c0_135] : memref<32x1xf32, #tpu.memory_space<vmem>>, vector<32x1xf32>
    %cst_136 = arith.constant dense<0.000000e+00> : vector<2x1xf32>
    %372 = tpu.matmul %370, %371, %cst_136 {dimension_numbers = #tpu.dot_dimension_numbers<[1], [0], [0], [1], [0, 0, 1, 1], [], []>} : vector<2x32xf32>, vector<32x1xf32>, vector<2x1xf32> -> vector<2x1xf32>
    %c0_137 = arith.constant 0 : index
    %c0_138 = arith.constant 0 : index
    %373 = vector.load %arg15[%c0_137, %c0_138] : memref<1x1xf32, #tpu.memory_space<vmem>>, vector<1x1xf32>
    %374 = vector.broadcast %373 : vector<1x1xf32> to vector<2x1xf32>
    %375 = arith.addf %372, %374 : vector<2x1xf32>
    %cst_139 = arith.constant 0.000000e+00 : f32
    %376 = vector.broadcast %cst_139 : f32 to vector<2x1xf32>
    %377 = arith.maximumf %375, %376 : vector<2x1xf32>
    %c0_140 = arith.constant 0 : index
    %c0_141 = arith.constant 0 : index
    %378 = vector.load %arg16[%c0_140, %c0_141] : memref<1x16xf32, #tpu.memory_space<vmem>>, vector<1x16xf32>
    %379 = vector.broadcast %377 : vector<2x1xf32> to vector<2x16xf32>
    %380 = vector.broadcast %378 : vector<1x16xf32> to vector<2x16xf32>
    %381 = arith.mulf %379, %380 : vector<2x16xf32>
    %c0_142 = arith.constant 0 : index
    %c0_143 = arith.constant 0 : index
    %382 = vector.load %arg17[%c0_142, %c0_143] : memref<1x16xf32, #tpu.memory_space<vmem>>, vector<1x16xf32>
    %383 = vector.broadcast %382 : vector<1x16xf32> to vector<2x16xf32>
    %384 = arith.addf %381, %383 : vector<2x16xf32>
    %cst_144 = arith.constant 0.000000e+00 : f32
    %385 = vector.broadcast %cst_144 : f32 to vector<2x16xf32>
    %386 = arith.maximumf %384, %385 : vector<2x16xf32>
    %c0_145 = arith.constant 0 : index
    %c0_146 = arith.constant 0 : index
    %387 = vector.load %arg18[%c0_145, %c0_146] : memref<16x1xf32, #tpu.memory_space<vmem>>, vector<16x1xf32>
    %cst_147 = arith.constant dense<0.000000e+00> : vector<2x1xf32>
    %388 = tpu.matmul %386, %387, %cst_147 {dimension_numbers = #tpu.dot_dimension_numbers<[1], [0], [0], [1], [0, 0, 1, 1], [], []>} : vector<2x16xf32>, vector<16x1xf32>, vector<2x1xf32> -> vector<2x1xf32>
    %c0_148 = arith.constant 0 : index
    %c0_149 = arith.constant 0 : index
    %389 = vector.load %arg19[%c0_148, %c0_149] : memref<1x1xf32, #tpu.memory_space<vmem>>, vector<1x1xf32>
    %390 = vector.broadcast %389 : vector<1x1xf32> to vector<2x1xf32>
    %391 = arith.addf %388, %390 : vector<2x1xf32>
    %392 = arith.negf %391 : vector<2x1xf32>
    %393 = math.exp %392 : vector<2x1xf32>
    %cst_150 = arith.constant 1.000000e+00 : f32
    %394 = vector.broadcast %cst_150 : f32 to vector<2x1xf32>
    %395 = arith.addf %394, %393 : vector<2x1xf32>
    %396 = arith.divf %394, %395 : vector<2x1xf32>
    %397 = arith.negf %396 : vector<2x1xf32>
    %398 = math.exp %397 : vector<2x1xf32>
    %cst_151 = arith.constant 1.000000e+00 : f32
    %399 = vector.broadcast %cst_151 : f32 to vector<2x1xf32>
    %400 = arith.addf %399, %398 : vector<2x1xf32>
    %401 = arith.divf %399, %400 : vector<2x1xf32>
    %c0_152 = arith.constant 0 : index
    %c0_153 = arith.constant 0 : index
    %402 = vector.load %arg20[%c0_152, %c0_153] : memref<2x1xf32, #tpu.memory_space<vmem>>, vector<2x1xf32>
    tpu.vector_store %arg20[%c0_152, %c0_153], %401 {strides = array<i32>} : memref<2x1xf32, #tpu.memory_space<vmem>>, vector<2x1xf32>,
    %c0_154 = arith.constant 0 : index
    %c0_155 = arith.constant 0 : index
    %403 = vector.load %arg21[%c0_154, %c0_155] : memref<2x32xf32, #tpu.memory_space<vmem>>, vector<2x32xf32>
    tpu.vector_store %arg21[%c0_154, %c0_155], %370 {strides = array<i32>} : memref<2x32xf32, #tpu.memory_space<vmem>>, vector<2x32xf32>,
    return
  }
  func.func @transform_0(%arg0: i32) -> (i32, i32) {
    %c0_i32 = arith.constant 0 : i32
    %c0_i32_0 = arith.constant 0 : i32
    %c0_i32_1 = arith.constant 0 : i32
    return %c0_i32, %c0_i32_0 : i32, i32
  }
  func.func @transform_1(%arg0: i32) -> (i32, i32) {
    %c0_i32 = arith.constant 0 : i32
    %c0_i32_0 = arith.constant 0 : i32
    %c0_i32_1 = arith.constant 0 : i32
    return %c0_i32, %c0_i32_0 : i32, i32
  }
  func.func @transform_2(%arg0: i32) -> (i32, i32) {
    %c0_i32 = arith.constant 0 : i32
    %c0_i32_0 = arith.constant 0 : i32
    %c0_i32_1 = arith.constant 0 : i32
    return %c0_i32, %c0_i32_0 : i32, i32
  }
  func.func @transform_3(%arg0: i32) -> (i32, i32) {
    %c0_i32 = arith.constant 0 : i32
    %c0_i32_0 = arith.constant 0 : i32
    %c0_i32_1 = arith.constant 0 : i32
    return %c0_i32, %c0_i32_0 : i32, i32
  }
  func.func @transform_4(%arg0: i32) -> (i32, i32) {
    %c0_i32 = arith.constant 0 : i32
    %c0_i32_0 = arith.constant 0 : i32
    %c0_i32_1 = arith.constant 0 : i32
    return %c0_i32, %c0_i32_0 : i32, i32
  }
  func.func @transform_5(%arg0: i32) -> (i32, i32) {
    %c0_i32 = arith.constant 0 : i32
    %c0_i32_0 = arith.constant 0 : i32
    %c0_i32_1 = arith.constant 0 : i32
    return %c0_i32, %c0_i32_0 : i32, i32
  }
  func.func @transform_6(%arg0: i32) -> (i32, i32) {
    %c0_i32 = arith.constant 0 : i32
    %c0_i32_0 = arith.constant 0 : i32
    %c0_i32_1 = arith.constant 0 : i32
    return %c0_i32, %c0_i32_0 : i32, i32
  }
  func.func @transform_7(%arg0: i32) -> (i32, i32) {
    %c0_i32 = arith.constant 0 : i32
    %c0_i32_0 = arith.constant 0 : i32
    %c0_i32_1 = arith.constant 0 : i32
    return %c0_i32, %c0_i32_0 : i32, i32
  }
  func.func @transform_8(%arg0: i32) -> (i32, i32) {
    %c0_i32 = arith.constant 0 : i32
    %c0_i32_0 = arith.constant 0 : i32
    %c0_i32_1 = arith.constant 0 : i32
    return %c0_i32, %c0_i32_0 : i32, i32
  }
  func.func @transform_9(%arg0: i32) -> (i32, i32) {
    %c0_i32 = arith.constant 0 : i32
    %c0_i32_0 = arith.constant 0 : i32
    %c0_i32_1 = arith.constant 0 : i32
    return %c0_i32, %c0_i32_0 : i32, i32
  }
  func.func @transform_10(%arg0: i32) -> (i32, i32) {
    %c0_i32 = arith.constant 0 : i32
    %c0_i32_0 = arith.constant 0 : i32
    %c0_i32_1 = arith.constant 0 : i32
    return %c0_i32, %c0_i32_0 : i32, i32
  }
  func.func @transform_11(%arg0: i32) -> (i32, i32) {
    %c0_i32 = arith.constant 0 : i32
    %c0_i32_0 = arith.constant 0 : i32
    %c0_i32_1 = arith.constant 0 : i32
    return %c0_i32, %c0_i32_0 : i32, i32
  }
  func.func @transform_12(%arg0: i32) -> (i32, i32) {
    %c0_i32 = arith.constant 0 : i32
    %c0_i32_0 = arith.constant 0 : i32
    %c0_i32_1 = arith.constant 0 : i32
    return %c0_i32, %c0_i32_0 : i32, i32
  }
  func.func @transform_13(%arg0: i32) -> (i32, i32) {
    %c0_i32 = arith.constant 0 : i32
    %c0_i32_0 = arith.constant 0 : i32
    %c0_i32_1 = arith.constant 0 : i32
    return %c0_i32, %c0_i32_0 : i32, i32
  }
  func.func @transform_14(%arg0: i32) -> (i32, i32) {
    %c0_i32 = arith.constant 0 : i32
    %c0_i32_0 = arith.constant 0 : i32
    %c0_i32_1 = arith.constant 0 : i32
    return %c0_i32, %c0_i32_0 : i32, i32
  }
  func.func @transform_15(%arg0: i32) -> (i32, i32) {
    %c0_i32 = arith.constant 0 : i32
    %c0_i32_0 = arith.constant 0 : i32
    %c0_i32_1 = arith.constant 0 : i32
    return %c0_i32, %c0_i32_0 : i32, i32
  }
  func.func @transform_16(%arg0: i32) -> (i32, i32) {
    %c0_i32 = arith.constant 0 : i32
    %c0_i32_0 = arith.constant 0 : i32
    %c0_i32_1 = arith.constant 0 : i32
    return %c0_i32, %c0_i32_0 : i32, i32
  }
  func.func @transform_17(%arg0: i32) -> (i32, i32) {
    %c0_i32 = arith.constant 0 : i32
    %c0_i32_0 = arith.constant 0 : i32
    %c0_i32_1 = arith.constant 0 : i32
    return %c0_i32, %c0_i32_0 : i32, i32
  }
  func.func @transform_18(%arg0: i32) -> (i32, i32) {
    %c0_i32 = arith.constant 0 : i32
    %c0_i32_0 = arith.constant 0 : i32
    %c0_i32_1 = arith.constant 0 : i32
    return %c0_i32, %c0_i32_0 : i32, i32
  }
  func.func @transform_19(%arg0: i32) -> (i32, i32) {
    %c0_i32 = arith.constant 0 : i32
    %c0_i32_0 = arith.constant 0 : i32
    %c0_i32_1 = arith.constant 0 : i32
    return %c0_i32, %c0_i32_0 : i32, i32
  }
  func.func @transform_20(%arg0: i32) -> (i32, i32) {
    %c0_i32 = arith.constant 0 : i32
    %c0_i32_0 = arith.constant 0 : i32
    %c0_i32_1 = arith.constant 0 : i32
    return %c0_i32, %c0_i32_0 : i32, i32
  }
}

</mosaic_0001>

<llo_original>
// kernel: tpu_custom_call.1
$region0: #{tpu_custom_call.1}
  #allocation0 [shape = 'u32[]', space=smem, size = 0x4, offset = 0x4, fixed_abs, tag = 'smem constant byte address 0x4 - core index']
  #allocation1 [shape = 'u32[72,128]{1,0:T(1,128)}', space=vmem, size = 0x9000, scoped, tag = 'internal scratch']
  #allocation2 [shape = 'f32[1,1]{1,0:T(1,128)S(1)}', space=vmem, size = 0x200, scoped, tag = 'scoped memory for tpu_custom_call.1']
  #allocation3 [shape = 'f32[1,1]{1,0:T(1,128)S(1)}', space=vmem, size = 0x200, scoped, tag = 'scoped memory for tpu_custom_call.1']
  %s0 = inlined_call_operand.vmem [shape: f32[16,4], index: 0, kind: input, shape index: {}]
  %s1 = inlined_call_operand.vmem [shape: f32[4,128], index: 1, kind: input, shape index: {}]
  %s2 = inlined_call_operand.vmem [shape: f32[1,128], index: 2, kind: input, shape index: {}]
  %s3 = inlined_call_operand.vmem [shape: f32[128,64], index: 3, kind: input, shape index: {}]
  %s4 = inlined_call_operand.vmem [shape: f32[1,64], index: 4, kind: input, shape index: {}]
  %s5 = inlined_call_operand.vmem [shape: f32[64,4], index: 5, kind: input, shape index: {}]
  %s6 = inlined_call_operand.vmem [shape: f32[1,4], index: 6, kind: input, shape index: {}]
  %s7 = inlined_call_operand.vmem [shape: f32[32,128], index: 7, kind: input, shape index: {}]
  %s8 = inlined_call_operand.vmem [shape: f32[1,128], index: 8, kind: input, shape index: {}]
  %s9 = inlined_call_operand.vmem [shape: f32[128,64], index: 9, kind: input, shape index: {}]
  %s10 = inlined_call_operand.vmem [shape: f32[1,64], index: 10, kind: input, shape index: {}]
  %s11 = inlined_call_operand.vmem [shape: f32[64,4], index: 11, kind: input, shape index: {}]
  %s12 = inlined_call_operand.vmem [shape: f32[1,4], index: 12, kind: input, shape index: {}]
  %s13 = inlined_call_operand.vmem [shape: f32[32,1], index: 13, kind: input, shape index: {}]
  %s14 = inlined_call_operand.<no memory space> [shape: f32[1,1], index: 14, kind: input, shape index: {}]
  %s15 = inlined_call_operand.vmem [shape: f32[1,16], index: 15, kind: input, shape index: {}]
  %s16 = inlined_call_operand.vmem [shape: f32[1,16], index: 16, kind: input, shape index: {}]
  %s17 = inlined_call_operand.vmem [shape: f32[16,1], index: 17, kind: input, shape index: {}]
  %s18 = inlined_call_operand.<no memory space> [shape: f32[1,1], index: 18, kind: input, shape index: {}]
  %s19 = inlined_call_operand.vmem [shape: f32[2,1], index: 19, kind: output, shape index: {0}]
  %s20 = inlined_call_operand.hbm [shape: f32[2,32], index: 20, kind: output, shape index: {1}]
  %21 = xla_tuple %s19, %s20
  %s22 = sld [smem:[#allocation0]]
  $region94: #{tpu_custom_call.1} parent=0
    _
  %s24 = ssub.s32 1, %s22
  %s25 = scalar_select 0, %s24, %s22
  %v26 = vstv %s14
  %27 = vst [vmem:[#allocation2] sm:$0x1] %v26
  %v28 = vstv %s18
  %29 = vst [vmem:[#allocation3] sm:$0x1] %v28
  $region1: #{tpu_custom_call.1} parent=0
    #allocation4 [shape = 'u8[1024]{0}', space=vmem, size = 0x400, scoped, tag = 'output window, operand 1, single buffered']
    #allocation5 [shape = 's32[1]{0}', space=sflag, size = 0x4, scoped, tag = 'scoped memory for tpu_custom_call.1']
    %30 = vsyncpa [#allocation5], 0
    // Predicated region
    $region2: #{tpu_custom_call.1} parent=1 // pred_check
      _
    $region3: #{tpu_custom_call.1} parent=1 // pred_check_branch
      %32 = sbr.rel (0) target = $region5
    $region4: #{tpu_custom_call.1} parent=1 // pred_region
      _
    $region5: #{tpu_custom_call.1} parent=1 // pred_fallthru
      _
    // Predicated region
    $region6: #{tpu_custom_call.1} parent=1 // pred_check
      _
    $region7: #{tpu_custom_call.1} parent=1 // pred_check_branch
      %34 = sbr.rel (0) target = $region9
    $region8: #{tpu_custom_call.1} parent=1 // pred_region
      _
    $region9: #{tpu_custom_call.1} parent=1 // pred_fallthru
      _
    // Predicated region
    $region10: #{tpu_custom_call.1} parent=1 // pred_check
      _
    $region11: #{tpu_custom_call.1} parent=1 // pred_check_branch
      %36 = sbr.rel (0) target = $region13
    $region12: #{tpu_custom_call.1} parent=1 // pred_region
      _
    $region13: #{tpu_custom_call.1} parent=1 // pred_fallthru
      _
    // Predicated region
    $region14: #{tpu_custom_call.1} parent=1 // pred_check
      _
    $region15: #{tpu_custom_call.1} parent=1 // pred_check_branch
      %38 = sbr.rel (0) target = $region17
    $region16: #{tpu_custom_call.1} parent=1 // pred_region
      _
    $region17: #{tpu_custom_call.1} parent=1 // pred_fallthru
      _
    // Predicated region
    $region18: #{tpu_custom_call.1} parent=1 // pred_check
      _
    $region19: #{tpu_custom_call.1} parent=1 // pred_check_branch
      %40 = sbr.rel (0) target = $region21
    $region20: #{tpu_custom_call.1} parent=1 // pred_region
      _
    $region21: #{tpu_custom_call.1} parent=1 // pred_fallthru
      _
    // Predicated region
    $region22: #{tpu_custom_call.1} parent=1 // pred_check
      _
    $region23: #{tpu_custom_call.1} parent=1 // pred_check_branch
      %42 = sbr.rel (0) target = $region25
    $region24: #{tpu_custom_call.1} parent=1 // pred_region
      _
    $region25: #{tpu_custom_call.1} parent=1 // pred_fallthru
      _
    // Predicated region
    $region26: #{tpu_custom_call.1} parent=1 // pred_check
      _
    $region27: #{tpu_custom_call.1} parent=1 // pred_check_branch
      %44 = sbr.rel (0) target = $region29
    $region28: #{tpu_custom_call.1} parent=1 // pred_region
      _
    $region29: #{tpu_custom_call.1} parent=1 // pred_fallthru
      _
    // Predicated region
    $region30: #{tpu_custom_call.1} parent=1 // pred_check
      _
    $region31: #{tpu_custom_call.1} parent=1 // pred_check_branch
      %46 = sbr.rel (0) target = $region33
    $region32: #{tpu_custom_call.1} parent=1 // pred_region
      _
    $region33: #{tpu_custom_call.1} parent=1 // pred_fallthru
      _
    // Predicated region
    $region34: #{tpu_custom_call.1} parent=1 // pred_check
      _
    $region35: #{tpu_custom_call.1} parent=1 // pred_check_branch
      %48 = sbr.rel (0) target = $region37
    $region36: #{tpu_custom_call.1} parent=1 // pred_region
      _
    $region37: #{tpu_custom_call.1} parent=1 // pred_fallthru
      _
    // Predicated region
    $region38: #{tpu_custom_call.1} parent=1 // pred_check
      _
    $region39: #{tpu_custom_call.1} parent=1 // pred_check_branch
      %50 = sbr.rel (0) target = $region41
    $region40: #{tpu_custom_call.1} parent=1 // pred_region
      _
    $region41: #{tpu_custom_call.1} parent=1 // pred_fallthru
      _
    // Predicated region
    $region42: #{tpu_custom_call.1} parent=1 // pred_check
      _
    $region43: #{tpu_custom_call.1} parent=1 // pred_check_branch
      %52 = sbr.rel (0) target = $region45
    $region44: #{tpu_custom_call.1} parent=1 // pred_region
      _
    $region45: #{tpu_custom_call.1} parent=1 // pred_fallthru
      _
    // Predicated region
    $region46: #{tpu_custom_call.1} parent=1 // pred_check
      _
    $region47: #{tpu_custom_call.1} parent=1 // pred_check_branch
      %54 = sbr.rel (0) target = $region49
    $region48: #{tpu_custom_call.1} parent=1 // pred_region
      _
    $region49: #{tpu_custom_call.1} parent=1 // pred_fallthru
      _
    // Predicated region
    $region50: #{tpu_custom_call.1} parent=1 // pred_check
      _
    $region51: #{tpu_custom_call.1} parent=1 // pred_check_branch
      %56 = sbr.rel (0) target = $region53
    $region52: #{tpu_custom_call.1} parent=1 // pred_region
      _
    $region53: #{tpu_custom_call.1} parent=1 // pred_fallthru
      _
    // Predicated region
    $region54: #{tpu_custom_call.1} parent=1 // pred_check
      _
    $region55: #{tpu_custom_call.1} parent=1 // pred_check_branch
      %58 = sbr.rel (0) target = $region57
    $region56: #{tpu_custom_call.1} parent=1 // pred_region
      _
    $region57: #{tpu_custom_call.1} parent=1 // pred_fallthru
      _
    // Predicated region
    $region58: #{tpu_custom_call.1} parent=1 // pred_check
      _
    $region59: #{tpu_custom_call.1} parent=1 // pred_check_branch
      %60 = sbr.rel (0) target = $region61
    $region60: #{tpu_custom_call.1} parent=1 // pred_region
      _
    $region61: #{tpu_custom_call.1} parent=1 // pred_fallthru
      _
    // Predicated region
    $region62: #{tpu_custom_call.1} parent=1 // pred_check
      _
    $region63: #{tpu_custom_call.1} parent=1 // pred_check_branch
      %62 = sbr.rel (0) target = $region65
    $region64: #{tpu_custom_call.1} parent=1 // pred_region
      _
    $region65: #{tpu_custom_call.1} parent=1 // pred_fallthru
      _
    // Predicated region
    $region66: #{tpu_custom_call.1} parent=1 // pred_check
      _
    $region67: #{tpu_custom_call.1} parent=1 // pred_check_branch
      %64 = sbr.rel (0) target = $region69
    $region68: #{tpu_custom_call.1} parent=1 // pred_region
      _
    $region69: #{tpu_custom_call.1} parent=1 // pred_fallthru
      _
    // Predicated region
    $region70: #{tpu_custom_call.1} parent=1 // pred_check
      _
    $region71: #{tpu_custom_call.1} parent=1 // pred_check_branch
      %66 = sbr.rel (0) target = $region73
    $region72: #{tpu_custom_call.1} parent=1 // pred_region
      _
    $region73: #{tpu_custom_call.1} parent=1 // pred_fallthru
      _
    // Predicated region
    $region74: #{tpu_custom_call.1} parent=1 // pred_check
      _
    $region75: #{tpu_custom_call.1} parent=1 // pred_check_branch
      %68 = sbr.rel (0) target = $region77
    $region76: #{tpu_custom_call.1} parent=1 // pred_region
      _
    $region77: #{tpu_custom_call.1} parent=1 // pred_fallthru
      _
    %v69 = vld [vmem:[%s0] sm:$0xff]
    %v70 = vld [vmem:[%s0 + $0x8] sm:$0xff]
    %v71 = vld [vmem:[%s1] sm:$0xf]
    %v72 = vld [vmem:[%s2] sm:$0x1]
    %v74 = vperm.slane %v72, 0
    %vm76 = vcmask 31744
    %v78 = vsel %vm76, %v69, 0
    %v81 = vsel %vm76, %v70, 0
    %vm83 = vcmask 1043456
    %v85 = vsel %vm83, %v71, 0
    %87 = vmatpush.msra.mxu0 0.0
    %88 = vmatpush.msra.mxu0 0.0
    %89 = vmatpush.msra.mxu0 0.0
    %90 = vmatpush.msra.mxu0 0.0
    %91 = vmatpush.msra.mxu0 0.0
    %92 = vmatpush.msra.mxu0 0.0
    %93 = vmatpush.msra.mxu0 0.0
    %94 = vmatpush.msra.mxu0 0.0
    %95 = vmatpush.msra.mxu0 0.0
    %96 = vmatpush.msra.mxu0 0.0
    %97 = vmatpush.msra.mxu0 0.0
    %98 = vmatpush.msra.mxu0 0.0
    %99 = vmatpush.msra.mxu0 0.0
    %100 = vmatpush.msra.mxu0 0.0
    %101 = vmatpush.msra.mxu0 0.0
    %102 = vmatpush.msra.mxu0 %v85
    %103 = vmatmul.f32.gmra.mxu0 %v78
    %v104 = vpop.f32.mrf.mxu0
    %v105 = vadd.f32 %v74, %v104
    %106 = vmatmul.f32.gmra.mxu0 %v81
    %v107 = vpop.f32.mrf.mxu0
    %v108 = vadd.f32 %v74, %v107
    %109 = vdwg.mxu0
    %v110 = vmax.f32 %v105, 0.0
    %v111 = vmax.f32 %v108, 0.0
    %v112 = vld [vmem:[%s3] sm:$0xff]
    %v113 = vld [vmem:[%s3 + $0x8] sm:$0xff]
    %v114 = vld [vmem:[%s3 + $0x10] sm:$0xff]
    %v115 = vld [vmem:[%s3 + $0x18] sm:$0xff]
    %v116 = vld [vmem:[%s3 + $0x20] sm:$0xff]
    %v117 = vld [vmem:[%s3 + $0x28] sm:$0xff]
    %v118 = vld [vmem:[%s3 + $0x30] sm:$0xff]
    %v119 = vld [vmem:[%s3 + $0x38] sm:$0xff]
    %v120 = vld [vmem:[%s3 + $0x40] sm:$0xff]
    %v121 = vld [vmem:[%s3 + $0x48] sm:$0xff]
    %v122 = vld [vmem:[%s3 + $0x50] sm:$0xff]
    %v123 = vld [vmem:[%s3 + $0x58] sm:$0xff]
    %v124 = vld [vmem:[%s3 + $0x60] sm:$0xff]
    %v125 = vld [vmem:[%s3 + $0x68] sm:$0xff]
    %v126 = vld [vmem:[%s3 + $0x70] sm:$0xff]
    %v127 = vld [vmem:[%s3 + $0x78] sm:$0xff]
    %v128 = vld [vmem:[%s4] sm:$0x1]
    %v130 = vperm.slane %v128, 0
    %132 = vmatpush.msra.mxu0 %v127
    %133 = vmatpush.msra.mxu0 %v126
    %134 = vmatpush.msra.mxu0 %v125
    %135 = vmatpush.msra.mxu0 %v124
    %136 = vmatpush.msra.mxu0 %v123
    %137 = vmatpush.msra.mxu0 %v122
    %138 = vmatpush.msra.mxu0 %v121
    %139 = vmatpush.msra.mxu0 %v120
    %140 = vmatpush.msra.mxu0 %v119
    %141 = vmatpush.msra.mxu0 %v118
    %142 = vmatpush.msra.mxu0 %v117
    %143 = vmatpush.msra.mxu0 %v116
    %144 = vmatpush.msra.mxu0 %v115
    %145 = vmatpush.msra.mxu0 %v114
    %146 = vmatpush.msra.mxu0 %v113
    %147 = vmatpush.msra.mxu0 %v112
    %148 = vmatmul.f32.gmra.mxu0 %v110
    %v149 = vpop.f32.mrf.mxu0
    %v150 = vadd.f32 %v130, %v149
    %151 = vmatmul.f32.gmra.mxu0 %v111
    %v152 = vpop.f32.mrf.mxu0
    %v153 = vadd.f32 %v130, %v152
    %154 = vdwg.mxu0
    %v155 = vmax.f32 %v150, 0.0
    %v156 = vmax.f32 %v153, 0.0
    %v157 = vld [vmem:[%s5] sm:$0xff]
    %v158 = vld [vmem:[%s5 + $0x8] sm:$0xff]
    %v159 = vld [vmem:[%s5 + $0x10] sm:$0xff]
    %v160 = vld [vmem:[%s5 + $0x18] sm:$0xff]
    %v161 = vld [vmem:[%s5 + $0x20] sm:$0xff]
    %v162 = vld [vmem:[%s5 + $0x28] sm:$0xff]
    %v163 = vld [vmem:[%s5 + $0x30] sm:$0xff]
    %v164 = vld [vmem:[%s5 + $0x38] sm:$0xff]
    %v165 = vld [vmem:[%s6] sm:$0x1]
    %v167 = vperm.slane %v165, 0
    %vm169 = vcmask 523264
    %v171 = vsel %vm169, %v155, 0
    %v174 = vsel %vm169, %v156, 0
    %176 = vmatpush.msra.mxu0 0.0
    %177 = vmatpush.msra.mxu0 0.0
    %178 = vmatpush.msra.mxu0 0.0
    %179 = vmatpush.msra.mxu0 0.0
    %180 = vmatpush.msra.mxu0 0.0
    %181 = vmatpush.msra.mxu0 0.0
    %182 = vmatpush.msra.mxu0 0.0
    %183 = vmatpush.msra.mxu0 0.0
    %184 = vmatpush.msra.mxu0 %v164
    %185 = vmatpush.msra.mxu0 %v163
    %186 = vmatpush.msra.mxu0 %v162
    %187 = vmatpush.msra.mxu0 %v161
    %188 = vmatpush.msra.mxu0 %v160
    %189 = vmatpush.msra.mxu0 %v159
    %190 = vmatpush.msra.mxu0 %v158
    %191 = vmatpush.msra.mxu0 %v157
    %192 = vmatmul.f32.gmra.mxu0 %v171
    %v193 = vpop.f32.mrf.mxu0
    %v194 = vadd.f32 %v167, %v193
    %195 = vmatmul.f32.gmra.mxu0 %v174
    %v196 = vpop.f32.mrf.mxu0
    %v197 = vadd.f32 %v167, %v196
    %198 = vdwg.mxu0
    %v199 = vxor.u32 %v194, 2147483648
    %v200 = vxor.u32 %v197, 2147483648
    %v201 = vmul.f32 %v199, 1.442695
    %v202 = vpow.pop %v201
    %v203 = vmul.f32 %v200, 1.442695
    %v204 = vpow.pop %v203
    %v205 = vadd.f32 %v202, 1.0
    %v206 = vadd.f32 %v204, 1.0
    %v207 = vrcp.pop %v205
    %v208 = vmul.f32 %v205, %v207
    %v209 = vsub.f32 1.0, %v208
    %v210 = vmul.f32 %v207, %v209
    %v211 = vadd.f32 %v207, %v210
    %vm212 = vweird.f32 %v205
    %vm213 = vweird.f32 %v207
    %vm214 = vmor %vm212, %vm213
    %v215 = vsel %vm214, %v207, %v211
    %v216 = vand.u32 2147483647, %v205
    %vm217 = vcmp.eq.f32.partialorder %v216, 8.507059e+37
    %v218 = vand.u32 %v205, 2147483648
    %v219 = vor.u32 1.1754944e-38, %v218
    %v220 = vsel %vm217, %v219, %v215
    %v221 = vmul.f32 1.0, %v220
    %v222 = vrcp.pop %v206
    %v223 = vmul.f32 %v206, %v222
    %v224 = vsub.f32 1.0, %v223
    %v225 = vmul.f32 %v222, %v224
    %v226 = vadd.f32 %v222, %v225
    %vm227 = vweird.f32 %v206
    %vm228 = vweird.f32 %v222
    %vm229 = vmor %vm227, %vm228
    %v230 = vsel %vm229, %v222, %v226
    %v231 = vand.u32 2147483647, %v206
    %vm232 = vcmp.eq.f32.partialorder %v231, 8.507059e+37
    %v233 = vand.u32 %v206, 2147483648
    %v234 = vor.u32 1.1754944e-38, %v233
    %v235 = vsel %vm232, %v234, %v230
    %v236 = vmul.f32 1.0, %v235
    %v237 = vld [vmem:[%s7] sm:$0xff]
    %v238 = vld [vmem:[%s7 + $0x8] sm:$0xff]
    %v239 = vld [vmem:[%s7 + $0x10] sm:$0xff]
    %v240 = vld [vmem:[%s7 + $0x18] sm:$0xff]
    %v241 = vld [vmem:[%s8] sm:$0x1]
    %v243 = vperm.slane %v241, 0
    %v245 = vld [vmem:[%s10] sm:$0x1]
    %v247 = vperm.slane %v245, 0
    %v249 = vld [vmem:[%s12] sm:$0x1]
    %v251 = vperm.slane %v249, 0
    %v253 = vlaneseq
    %v254 = vand.u32 %v253, 127
    %vm255 = vcmp.eq.s32.totalorder %v254, 3
    %v256 = vsel %vm255, 2.0, 1.0
    %vm257 = vcmask 261120
    %v259 = vsel %vm257, 0.0, 0
    %261 = vmatpush.msra.mxu0 0.0
    %262 = vmatpush.msra.mxu0 0.0
    %263 = vmatpush.msra.mxu0 0.0
    %264 = vmatpush.msra.mxu0 0.0
    %265 = vmatpush.msra.mxu0 0.0
    %266 = vmatpush.msra.mxu0 0.0
    %267 = vmatpush.msra.mxu0 0.0
    %268 = vmatpush.msra.mxu0 0.0
    %269 = vmatpush.msra.mxu0 0.0
    %270 = vmatpush.msra.mxu0 0.0
    %271 = vmatpush.msra.mxu0 0.0
    %272 = vmatpush.msra.mxu0 0.0
    %273 = vmatpush.msra.mxu0 %v240
    %274 = vmatpush.msra.mxu0 %v239
    %275 = vmatpush.msra.mxu0 %v238
    %276 = vmatpush.msra.mxu0 %v237
    %277 = vmatmul.f32.gmra.mxu0 %v259
    %v278 = vpop.f32.mrf.mxu0
    %v279 = vadd.f32 %v243, %v278
    %280 = vdwg.mxu0
    %v281 = vmax.f32 %v279, 0.0
    %v282 = vld [vmem:[%s9] sm:$0xff]
    %v283 = vld [vmem:[%s9 + $0x8] sm:$0xff]
    %v284 = vld [vmem:[%s9 + $0x10] sm:$0xff]
    %v285 = vld [vmem:[%s9 + $0x18] sm:$0xff]
    %v286 = vld [vmem:[%s9 + $0x20] sm:$0xff]
    %v287 = vld [vmem:[%s9 + $0x28] sm:$0xff]
    %v288 = vld [vmem:[%s9 + $0x30] sm:$0xff]
    %v289 = vld [vmem:[%s9 + $0x38] sm:$0xff]
    %v290 = vld [vmem:[%s9 + $0x40] sm:$0xff]
    %v291 = vld [vmem:[%s9 + $0x48] sm:$0xff]
    %v292 = vld [vmem:[%s9 + $0x50] sm:$0xff]
    %v293 = vld [vmem:[%s9 + $0x58] sm:$0xff]
    %v294 = vld [vmem:[%s9 + $0x60] sm:$0xff]
    %v295 = vld [vmem:[%s9 + $0x68] sm:$0xff]
    %v296 = vld [vmem:[%s9 + $0x70] sm:$0xff]
    %v297 = vld [vmem:[%s9 + $0x78] sm:$0xff]
    %298 = vmatpush.msra.mxu0 %v297
    %299 = vmatpush.msra.mxu0 %v296
    %300 = vmatpush.msra.mxu0 %v295
    %301 = vmatpush.msra.mxu0 %v294
    %302 = vmatpush.msra.mxu0 %v293
    %303 = vmatpush.msra.mxu0 %v292
    %304 = vmatpush.msra.mxu0 %v291
    %305 = vmatpush.msra.mxu0 %v290
    %306 = vmatpush.msra.mxu0 %v289
    %307 = vmatpush.msra.mxu0 %v288
    %308 = vmatpush.msra.mxu0 %v287
    %309 = vmatpush.msra.mxu0 %v286
    %310 = vmatpush.msra.mxu0 %v285
    %311 = vmatpush.msra.mxu0 %v284
    %312 = vmatpush.msra.mxu0 %v283
    %313 = vmatpush.msra.mxu0 %v282
    %314 = vmatmul.f32.gmra.mxu0 %v281
    %v315 = vpop.f32.mrf.mxu0
    %v316 = vadd.f32 %v247, %v315
    %317 = vdwg.mxu0
    %v318 = vmax.f32 %v316, 0.0
    %v319 = vld [vmem:[%s11] sm:$0xff]
    %v320 = vld [vmem:[%s11 + $0x8] sm:$0xff]
    %v321 = vld [vmem:[%s11 + $0x10] sm:$0xff]
    %v322 = vld [vmem:[%s11 + $0x18] sm:$0xff]
    %v323 = vld [vmem:[%s11 + $0x20] sm:$0xff]
    %v324 = vld [vmem:[%s11 + $0x28] sm:$0xff]
    %v325 = vld [vmem:[%s11 + $0x30] sm:$0xff]
    %v326 = vld [vmem:[%s11 + $0x38] sm:$0xff]
    %v328 = vsel %vm169, %v318, 0
    %330 = vmatpush.msra.mxu0 0.0
    %331 = vmatpush.msra.mxu0 0.0
    %332 = vmatpush.msra.mxu0 0.0
    %333 = vmatpush.msra.mxu0 0.0
    %334 = vmatpush.msra.mxu0 0.0
    %335 = vmatpush.msra.mxu0 0.0
    %336 = vmatpush.msra.mxu0 0.0
    %337 = vmatpush.msra.mxu0 0.0
    %338 = vmatpush.msra.mxu0 %v326
    %339 = vmatpush.msra.mxu0 %v325
    %340 = vmatpush.msra.mxu0 %v324
    %341 = vmatpush.msra.mxu0 %v323
    %342 = vmatpush.msra.mxu0 %v322
    %343 = vmatpush.msra.mxu0 %v321
    %344 = vmatpush.msra.mxu0 %v320
    %345 = vmatpush.msra.mxu0 %v319
    %346 = vmatmul.f32.gmra.mxu0 %v328
    %v347 = vpop.f32.mrf.mxu0
    %v348 = vadd.f32 %v251, %v347
    %349 = vdwg.mxu0
    %v350 = vxor.u32 %v348, 2147483648
    %v351 = vmul.f32 %v350, 1.442695
    %v352 = vpow.pop %v351
    %v353 = vadd.f32 %v352, 1.0
    %v354 = vrcp.pop %v353
    %v355 = vmul.f32 %v353, %v354
    %v356 = vsub.f32 1.0, %v355
    %v357 = vmul.f32 %v354, %v356
    %v358 = vadd.f32 %v354, %v357
    %vm359 = vweird.f32 %v353
    %vm360 = vweird.f32 %v354
    %vm361 = vmor %vm359, %vm360
    %v362 = vsel %vm361, %v354, %v358
    %v363 = vand.u32 2147483647, %v353
    %vm364 = vcmp.eq.f32.partialorder %v363, 8.507059e+37
    %v365 = vand.u32 %v353, 2147483648
    %v366 = vor.u32 1.1754944e-38, %v365
    %v367 = vsel %vm364, %v366, %v362
    %v368 = vmul.f32 1.0, %v367
    %v369 = vadd.f32 %v368, %v221
    %v370 = vmul.f32 %v369, %v256
    %v371 = vxor.u32 %v370, 2147483648
    %v372 = vmul.f32 %v371, 1.442695
    %v373 = vpow.pop %v372
    %v374 = vadd.f32 %v373, 1.0
    %v375 = vrcp.pop %v374
    %v376 = vmul.f32 %v374, %v375
    %v377 = vsub.f32 1.0, %v376
    %v378 = vmul.f32 %v375, %v377
    %v379 = vadd.f32 %v375, %v378
    %vm380 = vweird.f32 %v374
    %vm381 = vweird.f32 %v375
    %vm382 = vmor %vm380, %vm381
    %v383 = vsel %vm382, %v375, %v379
    %v384 = vand.u32 2147483647, %v374
    %vm385 = vcmp.eq.f32.partialorder %v384, 8.507059e+37
    %v386 = vand.u32 %v374, 2147483648
    %v387 = vor.u32 1.1754944e-38, %v386
    %v388 = vsel %vm385, %v387, %v383
    %v389 = vmul.f32 1.0, %v388
    %v390 = vmul.f32 %v389, 2.0
    %v391 = vsub.f32 %v390, 1.0
    %393 = vset.pattern.permute.xlu0 0
    %394 = vperm.xlu0 %393, %v389
    %v395 = vpop.permute.xlu0 %394
    %v397 = vmul.f32 %v395, 0.0
    %399 = vrot.lane.b32.xlu0 %v391, 126
    %v400 = vpop.permute.xlu0 %399
    %v402 = vmul.f32 %v389, %v400
    %404 = vset.pattern.permute.xlu0 1
    %405 = vperm.xlu0 %404, %v402
    %v406 = vpop.permute.xlu0 %405
    %v408 = vadd.f32 %v397, %v406
    %v409 = vtanh.pop %v408
    %410 = vset.pattern.permute.xlu0 2
    %411 = vperm.xlu0 %410, %v389
    %v412 = vpop.permute.xlu0 %411
    %v414 = vmul.f32 %v412, %v409
    %v416 = vsel %vm257, %v414, 0
    %418 = vmatpush.msra.mxu0 0.0
    %419 = vmatpush.msra.mxu0 0.0
    %420 = vmatpush.msra.mxu0 0.0
    %421 = vmatpush.msra.mxu0 0.0
    %422 = vmatpush.msra.mxu0 0.0
    %423 = vmatpush.msra.mxu0 0.0
    %424 = vmatpush.msra.mxu0 0.0
    %425 = vmatpush.msra.mxu0 0.0
    %426 = vmatpush.msra.mxu0 0.0
    %427 = vmatpush.msra.mxu0 0.0
    %428 = vmatpush.msra.mxu0 0.0
    %429 = vmatpush.msra.mxu0 0.0
    %430 = vmatpush.msra.mxu0 %v240
    %431 = vmatpush.msra.mxu0 %v239
    %432 = vmatpush.msra.mxu0 %v238
    %433 = vmatpush.msra.mxu0 %v237
    %434 = vmatmul.f32.gmra.mxu0 %v416
    %v435 = vpop.f32.mrf.mxu0
    %v436 = vadd.f32 %v243, %v435
    %437 = vdwg.mxu0
    %v438 = vmax.f32 %v436, 0.0
    %439 = vmatpush.msra.mxu0 %v297
    %440 = vmatpush.msra.mxu0 %v296
    %441 = vmatpush.msra.mxu0 %v295
    %442 = vmatpush.msra.mxu0 %v294
    %443 = vmatpush.msra.mxu0 %v293
    %444 = vmatpush.msra.mxu0 %v292
    %445 = vmatpush.msra.mxu0 %v291
    %446 = vmatpush.msra.mxu0 %v290
    %447 = vmatpush.msra.mxu0 %v289
    %448 = vmatpush.msra.mxu0 %v288
    %449 = vmatpush.msra.mxu0 %v287
    %450 = vmatpush.msra.mxu0 %v286
    %451 = vmatpush.msra.mxu0 %v285
    %452 = vmatpush.msra.mxu0 %v284
    %453 = vmatpush.msra.mxu0 %v283
    %454 = vmatpush.msra.mxu0 %v282
    %455 = vmatmul.f32.gmra.mxu0 %v438
    %v456 = vpop.f32.mrf.mxu0
    %v457 = vadd.f32 %v247, %v456
    %458 = vdwg.mxu0
    %v459 = vmax.f32 %v457, 0.0
    %v461 = vsel %vm169, %v459, 0
    %463 = vmatpush.msra.mxu0 0.0
    %464 = vmatpush.msra.mxu0 0.0
    %465 = vmatpush.msra.mxu0 0.0
    %466 = vmatpush.msra.mxu0 0.0
    %467 = vmatpush.msra.mxu0 0.0
    %468 = vmatpush.msra.mxu0 0.0
    %469 = vmatpush.msra.mxu0 0.0
    %470 = vmatpush.msra.mxu0 0.0
    %471 = vmatpush.msra.mxu0 %v326
    %472 = vmatpush.msra.mxu0 %v325
    %473 = vmatpush.msra.mxu0 %v324
    %474 = vmatpush.msra.mxu0 %v323
    %475 = vmatpush.msra.mxu0 %v322
    %476 = vmatpush.msra.mxu0 %v321
    %477 = vmatpush.msra.mxu0 %v320
    %478 = vmatpush.msra.mxu0 %v319
    %479 = vmatmul.f32.gmra.mxu0 %v461
    %v480 = vpop.f32.mrf.mxu0
    %v481 = vadd.f32 %v251, %v480
    %482 = vdwg.mxu0
    %v483 = vxor.u32 %v481, 2147483648
    %v484 = vmul.f32 %v483, 1.442695
    %v485 = vpow.pop %v484
    %v486 = vadd.f32 %v485, 1.0
    %v487 = vrcp.pop %v486
    %v488 = vmul.f32 %v486, %v487
    %v489 = vsub.f32 1.0, %v488
    %v490 = vmul.f32 %v487, %v489
    %v491 = vadd.f32 %v487, %v490
    %vm492 = vweird.f32 %v486
    %vm493 = vweird.f32 %v487
    %vm494 = vmor %vm492, %vm493
    %v495 = vsel %vm494, %v487, %v491
    %v496 = vand.u32 2147483647, %v486
    %vm497 = vcmp.eq.f32.partialorder %v496, 8.507059e+37
    %v498 = vand.u32 %v486, 2147483648
    %v499 = vor.u32 1.1754944e-38, %v498
    %v500 = vsel %vm497, %v499, %v495
    %v501 = vmul.f32 1.0, %v500
    %v503 = vrot.slane %v221, 2
    %v505 = vadd.f32 %v501, %v503
    %v506 = vmul.f32 %v505, %v256
    %v507 = vxor.u32 %v506, 2147483648
    %v508 = vmul.f32 %v507, 1.442695
    %v509 = vpow.pop %v508
    %v510 = vadd.f32 %v509, 1.0
    %v511 = vrcp.pop %v510
    %v512 = vmul.f32 %v510, %v511
    %v513 = vsub.f32 1.0, %v512
    %v514 = vmul.f32 %v511, %v513
    %v515 = vadd.f32 %v511, %v514
    %vm516 = vweird.f32 %v510
    %vm517 = vweird.f32 %v511
    %vm518 = vmor %vm516, %vm517
    %v519 = vsel %vm518, %v511, %v515
    %v520 = vand.u32 2147483647, %v510
    %vm521 = vcmp.eq.f32.partialorder %v520, 8.507059e+37
    %v522 = vand.u32 %v510, 2147483648
    %v523 = vor.u32 1.1754944e-38, %v522
    %v524 = vsel %vm521, %v523, %v519
    %v525 = vmul.f32 1.0, %v524
    %v526 = vmul.f32 %v525, 2.0
    %v527 = vsub.f32 %v526, 1.0
    %529 = vset.pattern.permute.xlu0 0
    %530 = vperm.xlu0 %529, %v525
    %v531 = vpop.permute.xlu0 %530
    %v533 = vmul.f32 %v531, %v408
    %535 = vrot.lane.b32.xlu0 %v527, 126
    %v536 = vpop.permute.xlu0 %535
    %v538 = vmul.f32 %v525, %v536
    %540 = vset.pattern.permute.xlu0 1
    %541 = vperm.xlu0 %540, %v538
    %v542 = vpop.permute.xlu0 %541
    %v544 = vadd.f32 %v533, %v542
    %v545 = vtanh.pop %v544
    %546 = vset.pattern.permute.xlu0 2
    %547 = vperm.xlu0 %546, %v525
    %v548 = vpop.permute.xlu0 %547
    %v550 = vmul.f32 %v548, %v545
    %v552 = vsel %vm257, %v550, 0
    %554 = vmatpush.msra.mxu0 0.0
    %555 = vmatpush.msra.mxu0 0.0
    %556 = vmatpush.msra.mxu0 0.0
    %557 = vmatpush.msra.mxu0 0.0
    %558 = vmatpush.msra.mxu0 0.0
    %559 = vmatpush.msra.mxu0 0.0
    %560 = vmatpush.msra.mxu0 0.0
    %561 = vmatpush.msra.mxu0 0.0
    %562 = vmatpush.msra.mxu0 0.0
    %563 = vmatpush.msra.mxu0 0.0
    %564 = vmatpush.msra.mxu0 0.0
    %565 = vmatpush.msra.mxu0 0.0
    %566 = vmatpush.msra.mxu0 %v240
    %567 = vmatpush.msra.mxu0 %v239
    %568 = vmatpush.msra.mxu0 %v238
    %569 = vmatpush.msra.mxu0 %v237
    %570 = vmatmul.f32.gmra.mxu0 %v552
    %v571 = vpop.f32.mrf.mxu0
    %v572 = vadd.f32 %v243, %v571
    %573 = vdwg.mxu0
    %v574 = vmax.f32 %v572, 0.0
    %575 = vmatpush.msra.mxu0 %v297
    %576 = vmatpush.msra.mxu0 %v296
    %577 = vmatpush.msra.mxu0 %v295
    %578 = vmatpush.msra.mxu0 %v294
    %579 = vmatpush.msra.mxu0 %v293
    %580 = vmatpush.msra.mxu0 %v292
    %581 = vmatpush.msra.mxu0 %v291
    %582 = vmatpush.msra.mxu0 %v290
    %583 = vmatpush.msra.mxu0 %v289
    %584 = vmatpush.msra.mxu0 %v288
    %585 = vmatpush.msra.mxu0 %v287
    %586 = vmatpush.msra.mxu0 %v286
    %587 = vmatpush.msra.mxu0 %v285
    %588 = vmatpush.msra.mxu0 %v284
    %589 = vmatpush.msra.mxu0 %v283
    %590 = vmatpush.msra.mxu0 %v282
    %591 = vmatmul.f32.gmra.mxu0 %v574
    %v592 = vpop.f32.mrf.mxu0
    %v593 = vadd.f32 %v247, %v592
    %594 = vdwg.mxu0
    %v595 = vmax.f32 %v593, 0.0
    %v597 = vsel %vm169, %v595, 0
    %599 = vmatpush.msra.mxu0 0.0
    %600 = vmatpush.msra.mxu0 0.0
    %601 = vmatpush.msra.mxu0 0.0
    %602 = vmatpush.msra.mxu0 0.0
    %603 = vmatpush.msra.mxu0 0.0
    %604 = vmatpush.msra.mxu0 0.0
    %605 = vmatpush.msra.mxu0 0.0
    %606 = vmatpush.msra.mxu0 0.0
    %607 = vmatpush.msra.mxu0 %v326
    %608 = vmatpush.msra.mxu0 %v325
    %609 = vmatpush.msra.mxu0 %v324
    %610 = vmatpush.msra.mxu0 %v323
    %611 = vmatpush.msra.mxu0 %v322
    %612 = vmatpush.msra.mxu0 %v321
    %613 = vmatpush.msra.mxu0 %v320
    %614 = vmatpush.msra.mxu0 %v319
    %615 = vmatmul.f32.gmra.mxu0 %v597
    %v616 = vpop.f32.mrf.mxu0
    %v617 = vadd.f32 %v251, %v616
    %618 = vdwg.mxu0
    %v619 = vxor.u32 %v617, 2147483648
    %v620 = vmul.f32 %v619, 1.442695
    %v621 = vpow.pop %v620
    %v622 = vadd.f32 %v621, 1.0
    %v623 = vrcp.pop %v622
    %v624 = vmul.f32 %v622, %v623
    %v625 = vsub.f32 1.0, %v624
    %v626 = vmul.f32 %v623, %v625
    %v627 = vadd.f32 %v623, %v626
    %vm628 = vweird.f32 %v622
    %vm629 = vweird.f32 %v623
    %vm630 = vmor %vm628, %vm629
    %v631 = vsel %vm630, %v623, %v627
    %v632 = vand.u32 2147483647, %v622
    %vm633 = vcmp.eq.f32.partialorder %v632, 8.507059e+37
    %v634 = vand.u32 %v622, 2147483648
    %v635 = vor.u32 1.1754944e-38, %v634
    %v636 = vsel %vm633, %v635, %v631
    %v637 = vmul.f32 1.0, %v636
    %v638 = vrot.slane %v221, 4
    %v640 = vadd.f32 %v637, %v638
    %v641 = vmul.f32 %v640, %v256
    %v642 = vxor.u32 %v641, 2147483648
    %v643 = vmul.f32 %v642, 1.442695
    %v644 = vpow.pop %v643
    %v645 = vadd.f32 %v644, 1.0
    %v646 = vrcp.pop %v645
    %v647 = vmul.f32 %v645, %v646
    %v648 = vsub.f32 1.0, %v647
    %v649 = vmul.f32 %v646, %v648
    %v650 = vadd.f32 %v646, %v649
    %vm651 = vweird.f32 %v645
    %vm652 = vweird.f32 %v646
    %vm653 = vmor %vm651, %vm652
    %v654 = vsel %vm653, %v646, %v650
    %v655 = vand.u32 2147483647, %v645
    %vm656 = vcmp.eq.f32.partialorder %v655, 8.507059e+37
    %v657 = vand.u32 %v645, 2147483648
    %v658 = vor.u32 1.1754944e-38, %v657
    %v659 = vsel %vm656, %v658, %v654
    %v660 = vmul.f32 1.0, %v659
    %v661 = vmul.f32 %v660, 2.0
    %v662 = vsub.f32 %v661, 1.0
    %664 = vset.pattern.permute.xlu0 0
    %665 = vperm.xlu0 %664, %v660
    %v666 = vpop.permute.xlu0 %665
    %v668 = vmul.f32 %v666, %v544
    %670 = vrot.lane.b32.xlu0 %v662, 126
    %v671 = vpop.permute.xlu0 %670
    %v673 = vmul.f32 %v660, %v671
    %675 = vset.pattern.permute.xlu0 1
    %676 = vperm.xlu0 %675, %v673
    %v677 = vpop.permute.xlu0 %676
    %v679 = vadd.f32 %v668, %v677
    %v680 = vtanh.pop %v679
    %681 = vset.pattern.permute.xlu0 2
    %682 = vperm.xlu0 %681, %v660
    %v683 = vpop.permute.xlu0 %682
    %v685 = vmul.f32 %v683, %v680
    %v687 = vsel %vm257, %v685, 0
    %689 = vmatpush.msra.mxu0 0.0
    %690 = vmatpush.msra.mxu0 0.0
    %691 = vmatpush.msra.mxu0 0.0
    %692 = vmatpush.msra.mxu0 0.0
    %693 = vmatpush.msra.mxu0 0.0
    %694 = vmatpush.msra.mxu0 0.0
    %695 = vmatpush.msra.mxu0 0.0
    %696 = vmatpush.msra.mxu0 0.0
    %697 = vmatpush.msra.mxu0 0.0
    %698 = vmatpush.msra.mxu0 0.0
    %699 = vmatpush.msra.mxu0 0.0
    %700 = vmatpush.msra.mxu0 0.0
    %701 = vmatpush.msra.mxu0 %v240
    %702 = vmatpush.msra.mxu0 %v239
    %703 = vmatpush.msra.mxu0 %v238
    %704 = vmatpush.msra.mxu0 %v237
    %705 = vmatmul.f32.gmra.mxu0 %v687
    %v706 = vpop.f32.mrf.mxu0
    %v707 = vadd.f32 %v243, %v706
    %708 = vdwg.mxu0
    %v709 = vmax.f32 %v707, 0.0
    %710 = vmatpush.msra.mxu0 %v297
    %711 = vmatpush.msra.mxu0 %v296
    %712 = vmatpush.msra.mxu0 %v295
    %713 = vmatpush.msra.mxu0 %v294
    %714 = vmatpush.msra.mxu0 %v293
    %715 = vmatpush.msra.mxu0 %v292
    %716 = vmatpush.msra.mxu0 %v291
    %717 = vmatpush.msra.mxu0 %v290
    %718 = vmatpush.msra.mxu0 %v289
    %719 = vmatpush.msra.mxu0 %v288
    %720 = vmatpush.msra.mxu0 %v287
    %721 = vmatpush.msra.mxu0 %v286
    %722 = vmatpush.msra.mxu0 %v285
    %723 = vmatpush.msra.mxu0 %v284
    %724 = vmatpush.msra.mxu0 %v283
    %725 = vmatpush.msra.mxu0 %v282
    %726 = vmatmul.f32.gmra.mxu0 %v709
    %v727 = vpop.f32.mrf.mxu0
    %v728 = vadd.f32 %v247, %v727
    %729 = vdwg.mxu0
    %v730 = vmax.f32 %v728, 0.0
    %v732 = vsel %vm169, %v730, 0
    %734 = vmatpush.msra.mxu0 0.0
    %735 = vmatpush.msra.mxu0 0.0
    %736 = vmatpush.msra.mxu0 0.0
    %737 = vmatpush.msra.mxu0 0.0
    %738 = vmatpush.msra.mxu0 0.0
    %739 = vmatpush.msra.mxu0 0.0
    %740 = vmatpush.msra.mxu0 0.0
    %741 = vmatpush.msra.mxu0 0.0
    %742 = vmatpush.msra.mxu0 %v326
    %743 = vmatpush.msra.mxu0 %v325
    %744 = vmatpush.msra.mxu0 %v324
    %745 = vmatpush.msra.mxu0 %v323
    %746 = vmatpush.msra.mxu0 %v322
    %747 = vmatpush.msra.mxu0 %v321
    %748 = vmatpush.msra.mxu0 %v320
    %749 = vmatpush.msra.mxu0 %v319
    %750 = vmatmul.f32.gmra.mxu0 %v732
    %v751 = vpop.f32.mrf.mxu0
    %v752 = vadd.f32 %v251, %v751
    %753 = vdwg.mxu0
    %v754 = vxor.u32 %v752, 2147483648
    %v755 = vmul.f32 %v754, 1.442695
    %v756 = vpow.pop %v755
    %v757 = vadd.f32 %v756, 1.0
    %v758 = vrcp.pop %v757
    %v759 = vmul.f32 %v757, %v758
    %v760 = vsub.f32 1.0, %v759
    %v761 = vmul.f32 %v758, %v760
    %v762 = vadd.f32 %v758, %v761
    %vm763 = vweird.f32 %v757
    %vm764 = vweird.f32 %v758
    %vm765 = vmor %vm763, %vm764
    %v766 = vsel %vm765, %v758, %v762
    %v767 = vand.u32 2147483647, %v757
    %vm768 = vcmp.eq.f32.partialorder %v767, 8.507059e+37
    %v769 = vand.u32 %v757, 2147483648
    %v770 = vor.u32 1.1754944e-38, %v769
    %v771 = vsel %vm768, %v770, %v766
    %v772 = vmul.f32 1.0, %v771
    %v773 = vrot.slane %v221, 6
    %v775 = vadd.f32 %v772, %v773
    %v776 = vmul.f32 %v775, %v256
    %v777 = vxor.u32 %v776, 2147483648
    %v778 = vmul.f32 %v777, 1.442695
    %v779 = vpow.pop %v778
    %v780 = vadd.f32 %v779, 1.0
    %v781 = vrcp.pop %v780
    %v782 = vmul.f32 %v780, %v781
    %v783 = vsub.f32 1.0, %v782
    %v784 = vmul.f32 %v781, %v783
    %v785 = vadd.f32 %v781, %v784
    %vm786 = vweird.f32 %v780
    %vm787 = vweird.f32 %v781
    %vm788 = vmor %vm786, %vm787
    %v789 = vsel %vm788, %v781, %v785
    %v790 = vand.u32 2147483647, %v780
    %vm791 = vcmp.eq.f32.partialorder %v790, 8.507059e+37
    %v792 = vand.u32 %v780, 2147483648
    %v793 = vor.u32 1.1754944e-38, %v792
    %v794 = vsel %vm791, %v793, %v789
    %v795 = vmul.f32 1.0, %v794
    %v796 = vmul.f32 %v795, 2.0
    %v797 = vsub.f32 %v796, 1.0
    %799 = vset.pattern.permute.xlu0 0
    %800 = vperm.xlu0 %799, %v795
    %v801 = vpop.permute.xlu0 %800
    %v803 = vmul.f32 %v801, %v679
    %805 = vrot.lane.b32.xlu0 %v797, 126
    %v806 = vpop.permute.xlu0 %805
    %v808 = vmul.f32 %v795, %v806
    %810 = vset.pattern.permute.xlu0 1
    %811 = vperm.xlu0 %810, %v808
    %v812 = vpop.permute.xlu0 %811
    %v814 = vadd.f32 %v803, %v812
    %v815 = vtanh.pop %v814
    %816 = vset.pattern.permute.xlu0 2
    %817 = vperm.xlu0 %816, %v795
    %v818 = vpop.permute.xlu0 %817
    %v820 = vmul.f32 %v818, %v815
    %v822 = vsel %vm257, %v820, 0
    %824 = vmatpush.msra.mxu0 0.0
    %825 = vmatpush.msra.mxu0 0.0
    %826 = vmatpush.msra.mxu0 0.0
    %827 = vmatpush.msra.mxu0 0.0
    %828 = vmatpush.msra.mxu0 0.0
    %829 = vmatpush.msra.mxu0 0.0
    %830 = vmatpush.msra.mxu0 0.0
    %831 = vmatpush.msra.mxu0 0.0
    %832 = vmatpush.msra.mxu0 0.0
    %833 = vmatpush.msra.mxu0 0.0
    %834 = vmatpush.msra.mxu0 0.0
    %835 = vmatpush.msra.mxu0 0.0
    %836 = vmatpush.msra.mxu0 %v240
    %837 = vmatpush.msra.mxu0 %v239
    %838 = vmatpush.msra.mxu0 %v238
    %839 = vmatpush.msra.mxu0 %v237
    %840 = vmatmul.f32.gmra.mxu0 %v822
    %v841 = vpop.f32.mrf.mxu0
    %v842 = vadd.f32 %v243, %v841
    %843 = vdwg.mxu0
    %v844 = vmax.f32 %v842, 0.0
    %845 = vmatpush.msra.mxu0 %v297
    %846 = vmatpush.msra.mxu0 %v296
    %847 = vmatpush.msra.mxu0 %v295
    %848 = vmatpush.msra.mxu0 %v294
    %849 = vmatpush.msra.mxu0 %v293
    %850 = vmatpush.msra.mxu0 %v292
    %851 = vmatpush.msra.mxu0 %v291
    %852 = vmatpush.msra.mxu0 %v290
    %853 = vmatpush.msra.mxu0 %v289
    %854 = vmatpush.msra.mxu0 %v288
    %855 = vmatpush.msra.mxu0 %v287
    %856 = vmatpush.msra.mxu0 %v286
    %857 = vmatpush.msra.mxu0 %v285
    %858 = vmatpush.msra.mxu0 %v284
    %859 = vmatpush.msra.mxu0 %v283
    %860 = vmatpush.msra.mxu0 %v282
    %861 = vmatmul.f32.gmra.mxu0 %v844
    %v862 = vpop.f32.mrf.mxu0
    %v863 = vadd.f32 %v247, %v862
    %864 = vdwg.mxu0
    %v865 = vmax.f32 %v863, 0.0
    %v867 = vsel %vm169, %v865, 0
    %869 = vmatpush.msra.mxu0 0.0
    %870 = vmatpush.msra.mxu0 0.0
    %871 = vmatpush.msra.mxu0 0.0
    %872 = vmatpush.msra.mxu0 0.0
    %873 = vmatpush.msra.mxu0 0.0
    %874 = vmatpush.msra.mxu0 0.0
    %875 = vmatpush.msra.mxu0 0.0
    %876 = vmatpush.msra.mxu0 0.0
    %877 = vmatpush.msra.mxu0 %v326
    %878 = vmatpush.msra.mxu0 %v325
    %879 = vmatpush.msra.mxu0 %v324
    %880 = vmatpush.msra.mxu0 %v323
    %881 = vmatpush.msra.mxu0 %v322
    %882 = vmatpush.msra.mxu0 %v321
    %883 = vmatpush.msra.mxu0 %v320
    %884 = vmatpush.msra.mxu0 %v319
    %885 = vmatmul.f32.gmra.mxu0 %v867
    %v886 = vpop.f32.mrf.mxu0
    %v887 = vadd.f32 %v251, %v886
    %888 = vdwg.mxu0
    %v889 = vxor.u32 %v887, 2147483648
    %v890 = vmul.f32 %v889, 1.442695
    %v891 = vpow.pop %v890
    %v892 = vadd.f32 %v891, 1.0
    %v893 = vrcp.pop %v892
    %v894 = vmul.f32 %v892, %v893
    %v895 = vsub.f32 1.0, %v894
    %v896 = vmul.f32 %v893, %v895
    %v897 = vadd.f32 %v893, %v896
    %vm898 = vweird.f32 %v892
    %vm899 = vweird.f32 %v893
    %vm900 = vmor %vm898, %vm899
    %v901 = vsel %vm900, %v893, %v897
    %v902 = vand.u32 2147483647, %v892
    %vm903 = vcmp.eq.f32.partialorder %v902, 8.507059e+37
    %v904 = vand.u32 %v892, 2147483648
    %v905 = vor.u32 1.1754944e-38, %v904
    %v906 = vsel %vm903, %v905, %v901
    %v907 = vmul.f32 1.0, %v906
    %v908 = vadd.f32 %v907, %v236
    %v909 = vmul.f32 %v908, %v256
    %v910 = vxor.u32 %v909, 2147483648
    %v911 = vmul.f32 %v910, 1.442695
    %v912 = vpow.pop %v911
    %v913 = vadd.f32 %v912, 1.0
    %v914 = vrcp.pop %v913
    %v915 = vmul.f32 %v913, %v914
    %v916 = vsub.f32 1.0, %v915
    %v917 = vmul.f32 %v914, %v916
    %v918 = vadd.f32 %v914, %v917
    %vm919 = vweird.f32 %v913
    %vm920 = vweird.f32 %v914
    %vm921 = vmor %vm919, %vm920
    %v922 = vsel %vm921, %v914, %v918
    %v923 = vand.u32 2147483647, %v913
    %vm924 = vcmp.eq.f32.partialorder %v923, 8.507059e+37
    %v925 = vand.u32 %v913, 2147483648
    %v926 = vor.u32 1.1754944e-38, %v925
    %v927 = vsel %vm924, %v926, %v922
    %v928 = vmul.f32 1.0, %v927
    %v929 = vmul.f32 %v928, 2.0
    %v930 = vsub.f32 %v929, 1.0
    %932 = vset.pattern.permute.xlu0 0
    %933 = vperm.xlu0 %932, %v928
    %v934 = vpop.permute.xlu0 %933
    %v936 = vmul.f32 %v934, %v814
    %938 = vrot.lane.b32.xlu0 %v930, 126
    %v939 = vpop.permute.xlu0 %938
    %v941 = vmul.f32 %v928, %v939
    %943 = vset.pattern.permute.xlu0 1
    %944 = vperm.xlu0 %943, %v941
    %v945 = vpop.permute.xlu0 %944
    %v947 = vadd.f32 %v936, %v945
    %v948 = vtanh.pop %v947
    %949 = vset.pattern.permute.xlu0 2
    %950 = vperm.xlu0 %949, %v928
    %v951 = vpop.permute.xlu0 %950
    %v953 = vmul.f32 %v951, %v948
    %v955 = vsel %vm257, %v953, 0
    %957 = vmatpush.msra.mxu0 0.0
    %958 = vmatpush.msra.mxu0 0.0
    %959 = vmatpush.msra.mxu0 0.0
    %960 = vmatpush.msra.mxu0 0.0
    %961 = vmatpush.msra.mxu0 0.0
    %962 = vmatpush.msra.mxu0 0.0
    %963 = vmatpush.msra.mxu0 0.0
    %964 = vmatpush.msra.mxu0 0.0
    %965 = vmatpush.msra.mxu0 0.0
    %966 = vmatpush.msra.mxu0 0.0
    %967 = vmatpush.msra.mxu0 0.0
    %968 = vmatpush.msra.mxu0 0.0
    %969 = vmatpush.msra.mxu0 %v240
    %970 = vmatpush.msra.mxu0 %v239
    %971 = vmatpush.msra.mxu0 %v238
    %972 = vmatpush.msra.mxu0 %v237
    %973 = vmatmul.f32.gmra.mxu0 %v955
    %v974 = vpop.f32.mrf.mxu0
    %v975 = vadd.f32 %v243, %v974
    %976 = vdwg.mxu0
    %v977 = vmax.f32 %v975, 0.0
    %978 = vmatpush.msra.mxu0 %v297
    %979 = vmatpush.msra.mxu0 %v296
    %980 = vmatpush.msra.mxu0 %v295
    %981 = vmatpush.msra.mxu0 %v294
    %982 = vmatpush.msra.mxu0 %v293
    %983 = vmatpush.msra.mxu0 %v292
    %984 = vmatpush.msra.mxu0 %v291
    %985 = vmatpush.msra.mxu0 %v290
    %986 = vmatpush.msra.mxu0 %v289
    %987 = vmatpush.msra.mxu0 %v288
    %988 = vmatpush.msra.mxu0 %v287
    %989 = vmatpush.msra.mxu0 %v286
    %990 = vmatpush.msra.mxu0 %v285
    %991 = vmatpush.msra.mxu0 %v284
    %992 = vmatpush.msra.mxu0 %v283
    %993 = vmatpush.msra.mxu0 %v282
    %994 = vmatmul.f32.gmra.mxu0 %v977
    %v995 = vpop.f32.mrf.mxu0
    %v996 = vadd.f32 %v247, %v995
    %997 = vdwg.mxu0
    %v998 = vmax.f32 %v996, 0.0
    %v1000 = vsel %vm169, %v998, 0
    %1002 = vmatpush.msra.mxu0 0.0
    %1003 = vmatpush.msra.mxu0 0.0
    %1004 = vmatpush.msra.mxu0 0.0
    %1005 = vmatpush.msra.mxu0 0.0
    %1006 = vmatpush.msra.mxu0 0.0
    %1007 = vmatpush.msra.mxu0 0.0
    %1008 = vmatpush.msra.mxu0 0.0
    %1009 = vmatpush.msra.mxu0 0.0
    %1010 = vmatpush.msra.mxu0 %v326
    %1011 = vmatpush.msra.mxu0 %v325
    %1012 = vmatpush.msra.mxu0 %v324
    %1013 = vmatpush.msra.mxu0 %v323
    %1014 = vmatpush.msra.mxu0 %v322
    %1015 = vmatpush.msra.mxu0 %v321
    %1016 = vmatpush.msra.mxu0 %v320
    %1017 = vmatpush.msra.mxu0 %v319
    %1018 = vmatmul.f32.gmra.mxu0 %v1000
    %v1019 = vpop.f32.mrf.mxu0
    %v1020 = vadd.f32 %v251, %v1019
    %1021 = vdwg.mxu0
    %v1022 = vxor.u32 %v1020, 2147483648
    %v1023 = vmul.f32 %v1022, 1.442695
    %v1024 = vpow.pop %v1023
    %v1025 = vadd.f32 %v1024, 1.0
    %v1026 = vrcp.pop %v1025
    %v1027 = vmul.f32 %v1025, %v1026
    %v1028 = vsub.f32 1.0, %v1027
    %v1029 = vmul.f32 %v1026, %v1028
    %v1030 = vadd.f32 %v1026, %v1029
    %vm1031 = vweird.f32 %v1025
    %vm1032 = vweird.f32 %v1026
    %vm1033 = vmor %vm1031, %vm1032
    %v1034 = vsel %vm1033, %v1026, %v1030
    %v1035 = vand.u32 2147483647, %v1025
    %vm1036 = vcmp.eq.f32.partialorder %v1035, 8.507059e+37
    %v1037 = vand.u32 %v1025, 2147483648
    %v1038 = vor.u32 1.1754944e-38, %v1037
    %v1039 = vsel %vm1036, %v1038, %v1034
    %v1040 = vmul.f32 1.0, %v1039
    %v1042 = vrot.slane %v236, 2
    %v1044 = vadd.f32 %v1040, %v1042
    %v1045 = vmul.f32 %v1044, %v256
    %v1046 = vxor.u32 %v1045, 2147483648
    %v1047 = vmul.f32 %v1046, 1.442695
    %v1048 = vpow.pop %v1047
    %v1049 = vadd.f32 %v1048, 1.0
    %v1050 = vrcp.pop %v1049
    %v1051 = vmul.f32 %v1049, %v1050
    %v1052 = vsub.f32 1.0, %v1051
    %v1053 = vmul.f32 %v1050, %v1052
    %v1054 = vadd.f32 %v1050, %v1053
    %vm1055 = vweird.f32 %v1049
    %vm1056 = vweird.f32 %v1050
    %vm1057 = vmor %vm1055, %vm1056
    %v1058 = vsel %vm1057, %v1050, %v1054
    %v1059 = vand.u32 2147483647, %v1049
    %vm1060 = vcmp.eq.f32.partialorder %v1059, 8.507059e+37
    %v1061 = vand.u32 %v1049, 2147483648
    %v1062 = vor.u32 1.1754944e-38, %v1061
    %v1063 = vsel %vm1060, %v1062, %v1058
    %v1064 = vmul.f32 1.0, %v1063
    %v1065 = vmul.f32 %v1064, 2.0
    %v1066 = vsub.f32 %v1065, 1.0
    %1068 = vset.pattern.permute.xlu0 0
    %1069 = vperm.xlu0 %1068, %v1064
    %v1070 = vpop.permute.xlu0 %1069
    %v1072 = vmul.f32 %v1070, %v947
    %1074 = vrot.lane.b32.xlu0 %v1066, 126
    %v1075 = vpop.permute.xlu0 %1074
    %v1077 = vmul.f32 %v1064, %v1075
    %1079 = vset.pattern.permute.xlu0 1
    %1080 = vperm.xlu0 %1079, %v1077
    %v1081 = vpop.permute.xlu0 %1080
    %v1083 = vadd.f32 %v1072, %v1081
    %v1084 = vtanh.pop %v1083
    %1085 = vset.pattern.permute.xlu0 2
    %1086 = vperm.xlu0 %1085, %v1064
    %v1087 = vpop.permute.xlu0 %1086
    %v1089 = vmul.f32 %v1087, %v1084
    %v1091 = vsel %vm257, %v1089, 0
    %1093 = vmatpush.msra.mxu0 0.0
    %1094 = vmatpush.msra.mxu0 0.0
    %1095 = vmatpush.msra.mxu0 0.0
    %1096 = vmatpush.msra.mxu0 0.0
    %1097 = vmatpush.msra.mxu0 0.0
    %1098 = vmatpush.msra.mxu0 0.0
    %1099 = vmatpush.msra.mxu0 0.0
    %1100 = vmatpush.msra.mxu0 0.0
    %1101 = vmatpush.msra.mxu0 0.0
    %1102 = vmatpush.msra.mxu0 0.0
    %1103 = vmatpush.msra.mxu0 0.0
    %1104 = vmatpush.msra.mxu0 0.0
    %1105 = vmatpush.msra.mxu0 %v240
    %1106 = vmatpush.msra.mxu0 %v239
    %1107 = vmatpush.msra.mxu0 %v238
    %1108 = vmatpush.msra.mxu0 %v237
    %1109 = vmatmul.f32.gmra.mxu0 %v1091
    %v1110 = vpop.f32.mrf.mxu0
    %v1111 = vadd.f32 %v243, %v1110
    %1112 = vdwg.mxu0
    %v1113 = vmax.f32 %v1111, 0.0
    %1114 = vmatpush.msra.mxu0 %v297
    %1115 = vmatpush.msra.mxu0 %v296
    %1116 = vmatpush.msra.mxu0 %v295
    %1117 = vmatpush.msra.mxu0 %v294
    %1118 = vmatpush.msra.mxu0 %v293
    %1119 = vmatpush.msra.mxu0 %v292
    %1120 = vmatpush.msra.mxu0 %v291
    %1121 = vmatpush.msra.mxu0 %v290
    %1122 = vmatpush.msra.mxu0 %v289
    %1123 = vmatpush.msra.mxu0 %v288
    %1124 = vmatpush.msra.mxu0 %v287
    %1125 = vmatpush.msra.mxu0 %v286
    %1126 = vmatpush.msra.mxu0 %v285
    %1127 = vmatpush.msra.mxu0 %v284
    %1128 = vmatpush.msra.mxu0 %v283
    %1129 = vmatpush.msra.mxu0 %v282
    %1130 = vmatmul.f32.gmra.mxu0 %v1113
    %v1131 = vpop.f32.mrf.mxu0
    %v1132 = vadd.f32 %v247, %v1131
    %1133 = vdwg.mxu0
    %v1134 = vmax.f32 %v1132, 0.0
    %v1136 = vsel %vm169, %v1134, 0
    %1138 = vmatpush.msra.mxu0 0.0
    %1139 = vmatpush.msra.mxu0 0.0
    %1140 = vmatpush.msra.mxu0 0.0
    %1141 = vmatpush.msra.mxu0 0.0
    %1142 = vmatpush.msra.mxu0 0.0
    %1143 = vmatpush.msra.mxu0 0.0
    %1144 = vmatpush.msra.mxu0 0.0
    %1145 = vmatpush.msra.mxu0 0.0
    %1146 = vmatpush.msra.mxu0 %v326
    %1147 = vmatpush.msra.mxu0 %v325
    %1148 = vmatpush.msra.mxu0 %v324
    %1149 = vmatpush.msra.mxu0 %v323
    %1150 = vmatpush.msra.mxu0 %v322
    %1151 = vmatpush.msra.mxu0 %v321
    %1152 = vmatpush.msra.mxu0 %v320
    %1153 = vmatpush.msra.mxu0 %v319
    %1154 = vmatmul.f32.gmra.mxu0 %v1136
    %v1155 = vpop.f32.mrf.mxu0
    %v1156 = vadd.f32 %v251, %v1155
    %1157 = vdwg.mxu0
    %v1158 = vxor.u32 %v1156, 2147483648
    %v1159 = vmul.f32 %v1158, 1.442695
    %v1160 = vpow.pop %v1159
    %v1161 = vadd.f32 %v1160, 1.0
    %v1162 = vrcp.pop %v1161
    %v1163 = vmul.f32 %v1161, %v1162
    %v1164 = vsub.f32 1.0, %v1163
    %v1165 = vmul.f32 %v1162, %v1164
    %v1166 = vadd.f32 %v1162, %v1165
    %vm1167 = vweird.f32 %v1161
    %vm1168 = vweird.f32 %v1162
    %vm1169 = vmor %vm1167, %vm1168
    %v1170 = vsel %vm1169, %v1162, %v1166
    %v1171 = vand.u32 2147483647, %v1161
    %vm1172 = vcmp.eq.f32.partialorder %v1171, 8.507059e+37
    %v1173 = vand.u32 %v1161, 2147483648
    %v1174 = vor.u32 1.1754944e-38, %v1173
    %v1175 = vsel %vm1172, %v1174, %v1170
    %v1176 = vmul.f32 1.0, %v1175
    %v1177 = vrot.slane %v236, 4
    %v1179 = vadd.f32 %v1176, %v1177
    %v1180 = vmul.f32 %v1179, %v256
    %v1181 = vxor.u32 %v1180, 2147483648
    %v1182 = vmul.f32 %v1181, 1.442695
    %v1183 = vpow.pop %v1182
    %v1184 = vadd.f32 %v1183, 1.0
    %v1185 = vrcp.pop %v1184
    %v1186 = vmul.f32 %v1184, %v1185
    %v1187 = vsub.f32 1.0, %v1186
    %v1188 = vmul.f32 %v1185, %v1187
    %v1189 = vadd.f32 %v1185, %v1188
    %vm1190 = vweird.f32 %v1184
    %vm1191 = vweird.f32 %v1185
    %vm1192 = vmor %vm1190, %vm1191
    %v1193 = vsel %vm1192, %v1185, %v1189
    %v1194 = vand.u32 2147483647, %v1184
    %vm1195 = vcmp.eq.f32.partialorder %v1194, 8.507059e+37
    %v1196 = vand.u32 %v1184, 2147483648
    %v1197 = vor.u32 1.1754944e-38, %v1196
    %v1198 = vsel %vm1195, %v1197, %v1193
    %v1199 = vmul.f32 1.0, %v1198
    %v1200 = vmul.f32 %v1199, 2.0
    %v1201 = vsub.f32 %v1200, 1.0
    %1203 = vset.pattern.permute.xlu0 0
    %1204 = vperm.xlu0 %1203, %v1199
    %v1205 = vpop.permute.xlu0 %1204
    %v1207 = vmul.f32 %v1205, %v1083
    %1209 = vrot.lane.b32.xlu0 %v1201, 126
    %v1210 = vpop.permute.xlu0 %1209
    %v1212 = vmul.f32 %v1199, %v1210
    %1214 = vset.pattern.permute.xlu0 1
    %1215 = vperm.xlu0 %1214, %v1212
    %v1216 = vpop.permute.xlu0 %1215
    %v1218 = vadd.f32 %v1207, %v1216
    %v1219 = vtanh.pop %v1218
    %1220 = vset.pattern.permute.xlu0 2
    %1221 = vperm.xlu0 %1220, %v1199
    %v1222 = vpop.permute.xlu0 %1221
    %v1224 = vmul.f32 %v1222, %v1219
    %v1226 = vsel %vm257, %v1224, 0
    %1228 = vmatpush.msra.mxu0 0.0
    %1229 = vmatpush.msra.mxu0 0.0
    %1230 = vmatpush.msra.mxu0 0.0
    %1231 = vmatpush.msra.mxu0 0.0
    %1232 = vmatpush.msra.mxu0 0.0
    %1233 = vmatpush.msra.mxu0 0.0
    %1234 = vmatpush.msra.mxu0 0.0
    %1235 = vmatpush.msra.mxu0 0.0
    %1236 = vmatpush.msra.mxu0 0.0
    %1237 = vmatpush.msra.mxu0 0.0
    %1238 = vmatpush.msra.mxu0 0.0
    %1239 = vmatpush.msra.mxu0 0.0
    %1240 = vmatpush.msra.mxu0 %v240
    %1241 = vmatpush.msra.mxu0 %v239
    %1242 = vmatpush.msra.mxu0 %v238
    %1243 = vmatpush.msra.mxu0 %v237
    %1244 = vmatmul.f32.gmra.mxu0 %v1226
    %v1245 = vpop.f32.mrf.mxu0
    %v1246 = vadd.f32 %v243, %v1245
    %1247 = vdwg.mxu0
    %v1248 = vmax.f32 %v1246, 0.0
    %1249 = vmatpush.msra.mxu0 %v297
    %1250 = vmatpush.msra.mxu0 %v296
    %1251 = vmatpush.msra.mxu0 %v295
    %1252 = vmatpush.msra.mxu0 %v294
    %1253 = vmatpush.msra.mxu0 %v293
    %1254 = vmatpush.msra.mxu0 %v292
    %1255 = vmatpush.msra.mxu0 %v291
    %1256 = vmatpush.msra.mxu0 %v290
    %1257 = vmatpush.msra.mxu0 %v289
    %1258 = vmatpush.msra.mxu0 %v288
    %1259 = vmatpush.msra.mxu0 %v287
    %1260 = vmatpush.msra.mxu0 %v286
    %1261 = vmatpush.msra.mxu0 %v285
    %1262 = vmatpush.msra.mxu0 %v284
    %1263 = vmatpush.msra.mxu0 %v283
    %1264 = vmatpush.msra.mxu0 %v282
    %1265 = vmatmul.f32.gmra.mxu0 %v1248
    %v1266 = vpop.f32.mrf.mxu0
    %v1267 = vadd.f32 %v247, %v1266
    %1268 = vdwg.mxu0
    %v1269 = vmax.f32 %v1267, 0.0
    %v1271 = vsel %vm169, %v1269, 0
    %1273 = vmatpush.msra.mxu0 0.0
    %1274 = vmatpush.msra.mxu0 0.0
    %1275 = vmatpush.msra.mxu0 0.0
    %1276 = vmatpush.msra.mxu0 0.0
    %1277 = vmatpush.msra.mxu0 0.0
    %1278 = vmatpush.msra.mxu0 0.0
    %1279 = vmatpush.msra.mxu0 0.0
    %1280 = vmatpush.msra.mxu0 0.0
    %1281 = vmatpush.msra.mxu0 %v326
    %1282 = vmatpush.msra.mxu0 %v325
    %1283 = vmatpush.msra.mxu0 %v324
    %1284 = vmatpush.msra.mxu0 %v323
    %1285 = vmatpush.msra.mxu0 %v322
    %1286 = vmatpush.msra.mxu0 %v321
    %1287 = vmatpush.msra.mxu0 %v320
    %1288 = vmatpush.msra.mxu0 %v319
    %1289 = vmatmul.f32.gmra.mxu0 %v1271
    %v1290 = vpop.f32.mrf.mxu0
    %v1291 = vadd.f32 %v251, %v1290
    %1292 = vdwg.mxu0
    %v1293 = vxor.u32 %v1291, 2147483648
    %v1294 = vmul.f32 %v1293, 1.442695
    %v1295 = vpow.pop %v1294
    %v1296 = vadd.f32 %v1295, 1.0
    %v1297 = vrcp.pop %v1296
    %v1298 = vmul.f32 %v1296, %v1297
    %v1299 = vsub.f32 1.0, %v1298
    %v1300 = vmul.f32 %v1297, %v1299
    %v1301 = vadd.f32 %v1297, %v1300
    %vm1302 = vweird.f32 %v1296
    %vm1303 = vweird.f32 %v1297
    %vm1304 = vmor %vm1302, %vm1303
    %v1305 = vsel %vm1304, %v1297, %v1301
    %v1306 = vand.u32 2147483647, %v1296
    %vm1307 = vcmp.eq.f32.partialorder %v1306, 8.507059e+37
    %v1308 = vand.u32 %v1296, 2147483648
    %v1309 = vor.u32 1.1754944e-38, %v1308
    %v1310 = vsel %vm1307, %v1309, %v1305
    %v1311 = vmul.f32 1.0, %v1310
    %v1312 = vrot.slane %v236, 6
    %v1314 = vadd.f32 %v1311, %v1312
    %v1315 = vmul.f32 %v1314, %v256
    %v1316 = vxor.u32 %v1315, 2147483648
    %v1317 = vmul.f32 %v1316, 1.442695
    %v1318 = vpow.pop %v1317
    %v1319 = vadd.f32 %v1318, 1.0
    %v1320 = vrcp.pop %v1319
    %v1321 = vmul.f32 %v1319, %v1320
    %v1322 = vsub.f32 1.0, %v1321
    %v1323 = vmul.f32 %v1320, %v1322
    %v1324 = vadd.f32 %v1320, %v1323
    %vm1325 = vweird.f32 %v1319
    %vm1326 = vweird.f32 %v1320
    %vm1327 = vmor %vm1325, %vm1326
    %v1328 = vsel %vm1327, %v1320, %v1324
    %v1329 = vand.u32 2147483647, %v1319
    %vm1330 = vcmp.eq.f32.partialorder %v1329, 8.507059e+37
    %v1331 = vand.u32 %v1319, 2147483648
    %v1332 = vor.u32 1.1754944e-38, %v1331
    %v1333 = vsel %vm1330, %v1332, %v1328
    %v1334 = vmul.f32 1.0, %v1333
    %v1335 = vmul.f32 %v1334, 2.0
    %v1336 = vsub.f32 %v1335, 1.0
    %1338 = vset.pattern.permute.xlu0 0
    %1339 = vperm.xlu0 %1338, %v1334
    %v1340 = vpop.permute.xlu0 %1339
    %v1342 = vmul.f32 %v1340, %v1218
    %1344 = vrot.lane.b32.xlu0 %v1336, 126
    %v1345 = vpop.permute.xlu0 %1344
    %v1347 = vmul.f32 %v1334, %v1345
    %1349 = vset.pattern.permute.xlu0 1
    %1350 = vperm.xlu0 %1349, %v1347
    %v1351 = vpop.permute.xlu0 %1350
    %v1353 = vadd.f32 %v1342, %v1351
    %v1354 = vtanh.pop %v1353
    %1355 = vset.pattern.permute.xlu0 2
    %1356 = vperm.xlu0 %1355, %v1334
    %v1357 = vpop.permute.xlu0 %1356
    %v1359 = vmul.f32 %v1357, %v1354
    %v1360 = vld [vmem:[%s13] sm:$0xff]
    %v1361 = vld [vmem:[%s13 + $0x8] sm:$0xff]
    %v1362 = vld [vmem:[%s13 + $0x10] sm:$0xff]
    %v1363 = vld [vmem:[%s13 + $0x18] sm:$0xff]
    %v1364 = vld [vmem:[#allocation2] sm:$0x1]
    %v1366 = vperm.slane %v1364, 0
    %v1369 = vsel %vm257, %v1359, 0
    %1371 = vmatpush.msra.mxu0 0.0
    %1372 = vmatpush.msra.mxu0 0.0
    %1373 = vmatpush.msra.mxu0 0.0
    %1374 = vmatpush.msra.mxu0 0.0
    %1375 = vmatpush.msra.mxu0 0.0
    %1376 = vmatpush.msra.mxu0 0.0
    %1377 = vmatpush.msra.mxu0 0.0
    %1378 = vmatpush.msra.mxu0 0.0
    %1379 = vmatpush.msra.mxu0 0.0
    %1380 = vmatpush.msra.mxu0 0.0
    %1381 = vmatpush.msra.mxu0 0.0
    %1382 = vmatpush.msra.mxu0 0.0
    %1383 = vmatpush.msra.mxu0 %v1363
    %1384 = vmatpush.msra.mxu0 %v1362
    %1385 = vmatpush.msra.mxu0 %v1361
    %1386 = vmatpush.msra.mxu0 %v1360
    %1387 = vmatmul.f32.gmra.mxu0 %v1369
    %v1388 = vpop.f32.mrf.mxu0
    %v1389 = vadd.f32 %v1366, %v1388
    %1390 = vdwg.mxu0
    %v1391 = vmax.f32 %v1389, 0.0
    %v1392 = vld [vmem:[%s15] sm:$0x1]
    %1394 = vset.pattern.permute.xlu0 0
    %1395 = vperm.xlu0 %1394, %v1391
    %v1396 = vpop.permute.xlu0 %1395
    %v1399 = vperm.slane %v1392, 0
    %v1401 = vmul.f32 %v1396, %v1399
    %v1402 = vld [vmem:[%s16] sm:$0x1]
    %v1404 = vperm.slane %v1402, 0
    %v1406 = vadd.f32 %v1401, %v1404
    %v1407 = vmax.f32 %v1406, 0.0
    %v1408 = vld [vmem:[%s17] sm:$0xff]
    %v1409 = vld [vmem:[%s17 + $0x8] sm:$0xff]
    %v1410 = vld [vmem:[#allocation3] sm:$0x1]
    %v1412 = vperm.slane %v1410, 0
    %vm1414 = vcmask 130048
    %v1416 = vsel %vm1414, %v1407, 0
    %1418 = vmatpush.msra.mxu0 0.0
    %1419 = vmatpush.msra.mxu0 0.0
    %1420 = vmatpush.msra.mxu0 0.0
    %1421 = vmatpush.msra.mxu0 0.0
    %1422 = vmatpush.msra.mxu0 0.0
    %1423 = vmatpush.msra.mxu0 0.0
    %1424 = vmatpush.msra.mxu0 0.0
    %1425 = vmatpush.msra.mxu0 0.0
    %1426 = vmatpush.msra.mxu0 0.0
    %1427 = vmatpush.msra.mxu0 0.0
    %1428 = vmatpush.msra.mxu0 0.0
    %1429 = vmatpush.msra.mxu0 0.0
    %1430 = vmatpush.msra.mxu0 0.0
    %1431 = vmatpush.msra.mxu0 0.0
    %1432 = vmatpush.msra.mxu0 %v1409
    %1433 = vmatpush.msra.mxu0 %v1408
    %1434 = vmatmul.f32.gmra.mxu0 %v1416
    %v1435 = vpop.f32.mrf.mxu0
    %v1436 = vadd.f32 %v1412, %v1435
    %1437 = vdwg.mxu0
    %v1438 = vxor.u32 %v1436, 2147483648
    %v1439 = vmul.f32 %v1438, 1.442695
    %v1440 = vpow.pop %v1439
    %v1441 = vadd.f32 %v1440, 1.0
    %v1442 = vrcp.pop %v1441
    %v1443 = vmul.f32 %v1441, %v1442
    %v1444 = vsub.f32 1.0, %v1443
    %v1445 = vmul.f32 %v1442, %v1444
    %v1446 = vadd.f32 %v1442, %v1445
    %vm1447 = vweird.f32 %v1441
    %vm1448 = vweird.f32 %v1442
    %vm1449 = vmor %vm1447, %vm1448
    %v1450 = vsel %vm1449, %v1442, %v1446
    %v1451 = vand.u32 2147483647, %v1441
    %vm1452 = vcmp.eq.f32.partialorder %v1451, 8.507059e+37
    %v1453 = vand.u32 %v1441, 2147483648
    %v1454 = vor.u32 1.1754944e-38, %v1453
    %v1455 = vsel %vm1452, %v1454, %v1450
    %v1456 = vmul.f32 1.0, %v1455
    %v1457 = vxor.u32 %v1456, 2147483648
    %v1458 = vmul.f32 %v1457, 1.442695
    %v1459 = vpow.pop %v1458
    %v1460 = vadd.f32 %v1459, 1.0
    %v1461 = vrcp.pop %v1460
    %v1462 = vmul.f32 %v1460, %v1461
    %v1463 = vsub.f32 1.0, %v1462
    %v1464 = vmul.f32 %v1461, %v1463
    %v1465 = vadd.f32 %v1461, %v1464
    %vm1466 = vweird.f32 %v1460
    %vm1467 = vweird.f32 %v1461
    %vm1468 = vmor %vm1466, %vm1467
    %v1469 = vsel %vm1468, %v1461, %v1465
    %v1470 = vand.u32 2147483647, %v1460
    %vm1471 = vcmp.eq.f32.partialorder %v1470, 8.507059e+37
    %v1472 = vand.u32 %v1460, 2147483648
    %v1473 = vor.u32 1.1754944e-38, %v1472
    %v1474 = vsel %vm1471, %v1473, %v1469
    %v1475 = vmul.f32 1.0, %v1474
    %vm1476 = vcmask 1024
    %1477 = vst.msk [vmem:[%s19] sm:$0x3] %vm1476, %v1475
    %vm1478 = vcmask 254976
    %1479 = vst.msk [vmem:[#allocation4] sm:$0x3] %vm1478, %v1359
    // Predicated region
    $region78: #{tpu_custom_call.1} parent=1 // pred_check
      _
    $region79: #{tpu_custom_call.1} parent=1 // pred_check_branch
      %1481 = sbr.rel (0) target = $region81
    $region80: #{tpu_custom_call.1} parent=1 // pred_region
      _
    $region81: #{tpu_custom_call.1} parent=1 // pred_fallthru
      _
    // Predicated region
    $region82: #{tpu_custom_call.1} parent=1 // pred_check
      _
    $region83: #{tpu_custom_call.1} parent=1 // pred_check_branch
      %1483 = sbr.rel (0) target = $region85
    $region84: #{tpu_custom_call.1} parent=1 // pred_region
      %1485 = vsyncadd [#allocation5], 0
      %s1487 = sshll.u32 [#allocation4], 4
      %s1488 = int_to_ptr.vmem [resolvable:$true] %s1487
      %s1489 = sshll.u32 %s20, 4
      %s1490 = int_to_ptr.hbm [resolvable:$true] %s1489
      %1492 = dma.vmem_to_hbm [thread:$0]  %s1488, 32, %s1490, [#allocation5]
    $region85: #{tpu_custom_call.1} parent=1 // pred_fallthru
      _
    // Predicated region
    $region86: #{tpu_custom_call.1} parent=1 // pred_check
      _
    $region87: #{tpu_custom_call.1} parent=1 // pred_check_branch
      %1494 = sbr.rel (0) target = $region89
    $region88: #{tpu_custom_call.1} parent=1 // pred_region
      _
    $region89: #{tpu_custom_call.1} parent=1 // pred_fallthru
      _
    // Predicated region
    $region90: #{tpu_custom_call.1} parent=1 // pred_check
      _
    $region91: #{tpu_custom_call.1} parent=1 // pred_check_branch
      %1496 = sbr.rel (0) target = $region93
    $region92: #{tpu_custom_call.1} parent=1 // pred_region
      %1498 = dma.done [#allocation5], 32
    $region93: #{tpu_custom_call.1} parent=1 // pred_fallthru
      _
    %1499 = vsyncpa [#allocation5], 1

</llo_original>
